<compile_context>
chip_gen: v5e
topology: v5e:2x2
jax: 0.10.0
libtpu: 0.0.40
codegen_flags: <defaults>
</compile_context>

<pallas_src>
import functools
import math

import jax
import jax.numpy as jnp
from jax.experimental import pallas as pl
from jax.experimental.pallas import tpu as pltpu


# -----------------------------------------------------------------------------
# Kernel bodies.  The preferred body is a single strided lane read per tile.
# The alternatives are lowering fallbacks only (tried in order if a Mosaic
# version lacks the strided-slice feature); the last one is the original
# per-column copy, which is known to lower everywhere.
# -----------------------------------------------------------------------------
def _kernel_strided_ref(x_ref, o_ref, *, step):
    out_cols = o_ref.shape[-1]
    o_ref[...] = x_ref[:, pl.ds(0, out_cols, stride=step)]


def _kernel_strided_value(x_ref, o_ref, *, step):
    o_ref[...] = x_ref[...][:, ::step]


def _kernel_unrolled(x_ref, o_ref, *, step):
    for o in range(o_ref.shape[-1]):
        o_ref[:, pl.ds(o, 1)] = x_ref[:, pl.ds(o * step, 1)]


_KERNEL_BODIES = (_kernel_strided_ref, _kernel_strided_value, _kernel_unrolled)


def downsample(x, step, *, block_bytes=4 << 20):
    """Pallas equivalent of Downsample.forward: x[..., ::step]."""
    in_dim = x.shape[-1]
    if in_dim % step != 0:
        raise ValueError(
            f"in_dim should be a multiple of step. Got {in_dim} and {step}."
        )
    out_dim = in_dim // step

    lead = x.shape[:-1]
    n_rows = int(math.prod(lead)) if lead else 1
    if n_rows == 0:
        return jnp.zeros((*lead, out_dim), x.dtype)

    itemsize = jnp.dtype(x.dtype).itemsize

    # ---- Layout plumbing (pure reshapes, no data movement) ------------------
    # Fold contiguous rows into the lane axis until the OUTPUT last dim is a
    # multiple of 128 lanes.  Valid because in_dim % step == 0 makes the stride
    # pattern continue seamlessly across row boundaries.
    g = 1
    while (n_rows % (2 * g) == 0
           and (g * out_dim) % 128 != 0
           and g * out_dim < 1024):
        g *= 2
    rows = n_rows // g
    c_in = g * in_dim
    c_out = g * out_dim
    x2 = x.reshape(rows, c_in)

    # ---- Tile sizing ---------------------------------------------------------
    # Sublane packing: 8 rows for 32-bit, 16 for bf16, 32 for int8/fp8.
    sub = max(8, 32 // itemsize)
    if rows <= sub:
        row_tile = rows                      # block == full dim -> always legal
    else:
        row_tile = max(1, block_bytes // max(1, c_in * itemsize))
        if rows >= 4 * sub:
            # Keep >= ~4 grid steps: feeds both v7x TensorCores via the
            # "parallel" axis and keeps the DMA pipeline deep.
            row_tile = min(row_tile, -(-rows // 4))
        row_tile = max(sub, (row_tile // sub) * sub)
        if row_tile >= rows:
            row_tile = rows

    n_blocks = -(-rows // row_tile)          # cdiv
    rows_pad = n_blocks * row_tile
    if rows_pad != rows:
        x2 = jnp.pad(x2, ((0, rows_pad - rows), (0, 0)))

    # ---- pallas_call ---------------------------------------------------------
    in_blk = row_tile * c_in * itemsize
    out_blk = row_tile * c_out * itemsize
    # Double-buffered in+out blocks plus margin; well under v7x's 64 MiB VMEM
    # at the default block_bytes, explicitly above v5e's 16 MiB default limit.
    vmem_limit = int(min(max(2 * (in_blk + out_blk) + (2 << 20), 16 << 20),
                         48 << 20))

    cost = pl.CostEstimate(
        flops=0,
        transcendentals=0,
        bytes_accessed=int(rows_pad * (c_in + c_out) * itemsize),
    )

    def build(body):
        return pl.pallas_call(
            functools.partial(body, step=step),
            out_shape=jax.ShapeDtypeStruct((rows_pad, c_out), x.dtype),
            grid_spec=pltpu.PrefetchScalarGridSpec(
                num_scalar_prefetch=0,
                grid=(n_blocks,),
                in_specs=[pl.BlockSpec((row_tile, c_in), lambda i: (i, 0))],
                out_specs=pl.BlockSpec((row_tile, c_out), lambda i: (i, 0)),
            ),
            compiler_params=pltpu.CompilerParams(
                dimension_semantics=("parallel",),
                vmem_limit_bytes=vmem_limit,
            ),
            cost_estimate=cost,
        )

    y2 = None
    last_err = None
    for body in _KERNEL_BODIES:
        try:
            y2 = jax.block_until_ready(build(body)(x2))
            break
        except Exception as err:  # lowering feature unavailable -> next variant
            last_err = err
    if y2 is None:
        raise last_err

    if rows_pad != rows:
        y2 = y2[:rows]
    return y2.reshape(*lead, out_dim)


if __name__ == "__main__":
    key = jax.random.PRNGKey(0)

    # Primary shape consistent with the module: (batch, seq, in_dim), step | in_dim.
    B, S, in_dim, step = 2, 8, 32, 4
    x = jax.random.normal(key, (B, S, in_dim), dtype=jnp.float32)
    y = jax.block_until_ready(downsample(x, step))
    ref = x[..., ::step]
    assert y.shape == (B, S, in_dim // step), y.shape
    assert jnp.array_equal(y, ref), "mismatch vs reference strided selection"

    # Extra coverage: odd row count (exercises cdiv + padded last tile).
    k2, k3 = jax.random.split(key)
    x2 = jax.random.normal(k2, (3, 5, 64), dtype=jnp.float32)
    y2 = jax.block_until_ready(downsample(x2, 2))
    assert jnp.array_equal(y2, x2[..., ::2]), "mismatch on padded-tile case"

    # Extra coverage: bf16 (sublane packing path).
    x3 = jax.random.normal(k3, (4, 16, 256), dtype=jnp.bfloat16)
    y3 = jax.block_until_ready(downsample(x3, 8))
    assert jnp.array_equal(y3, x3[..., ::8]), "mismatch on bf16 case"

    print("KERNEL_OK")
</pallas_src>

<mosaic_0001>
module attributes {stable_mosaic.version = 11 : i64} {
  func.func @_kernel_strided_ref(%arg0: i32, %arg1: memref<1x512xf32, #tpu.memory_space<vmem>>, %arg2: memref<1x128xf32, #tpu.memory_space<vmem>>) attributes {dimension_semantics = [#tpu.dimension_semantics<parallel>], iteration_bounds = array<i64: 1>, scalar_prefetch = 0 : i64, scratch_operands = 0 : i64, tpu.core_type = #tpu.core_type<tc>, window_params = [{transform_indices = @transform_0, window_bounds = array<i64: 1, 512>}, {transform_indices = @transform_1, window_bounds = array<i64: 1, 128>}]} {
    %c0 = arith.constant 0 : index
    %c0_0 = arith.constant 0 : index
    %0 = tpu.strided_load %arg1[%c0, %c0_0] {strides = array<i32: 1, 4>} : memref<1x512xf32, #tpu.memory_space<vmem>>, vector<1x128xf32>
    %c0_1 = arith.constant 0 : index
    %c0_2 = arith.constant 0 : index
    %1 = vector.load %arg2[%c0_1, %c0_2] : memref<1x128xf32, #tpu.memory_space<vmem>>, vector<1x128xf32>
    tpu.vector_store %arg2[%c0_1, %c0_2], %0 {strides = array<i32>} : memref<1x128xf32, #tpu.memory_space<vmem>>, vector<1x128xf32>,
    return
  }
  func.func @transform_0(%arg0: i32) -> (i32, i32) {
    %c0_i32 = arith.constant 0 : i32
    %c0_i32_0 = arith.constant 0 : i32
    return %arg0, %c0_i32 : i32, i32
  }
  func.func @transform_1(%arg0: i32) -> (i32, i32) {
    %c0_i32 = arith.constant 0 : i32
    %c0_i32_0 = arith.constant 0 : i32
    return %arg0, %c0_i32 : i32, i32
  }
}

module attributes {stable_mosaic.version = 11 : i64} {
  func.func @_kernel_unrolled(%arg0: i32, %arg1: memref<1x512xf32, #tpu.memory_space<vmem>>, %arg2: memref<1x128xf32, #tpu.memory_space<vmem>>) attributes {dimension_semantics = [#tpu.dimension_semantics<parallel>], iteration_bounds = array<i64: 1>, scalar_prefetch = 0 : i64, scratch_operands = 0 : i64, tpu.core_type = #tpu.core_type<tc>, window_params = [{transform_indices = @transform_0, window_bounds = array<i64: 1, 512>}, {transform_indices = @transform_1, window_bounds = array<i64: 1, 128>}]} {
    %c0 = arith.constant 0 : index
    %c0_0 = arith.constant 0 : index
    %0 = vector.load %arg1[%c0, %c0_0] : memref<1x512xf32, #tpu.memory_space<vmem>>, vector<1x1xf32>
    %c0_1 = arith.constant 0 : index
    %c0_2 = arith.constant 0 : index
    %1 = vector.load %arg2[%c0_1, %c0_2] : memref<1x128xf32, #tpu.memory_space<vmem>>, vector<1x1xf32>
    tpu.vector_store %arg2[%c0_1, %c0_2], %0 {strides = array<i32>} : memref<1x128xf32, #tpu.memory_space<vmem>>, vector<1x1xf32>,
    %c0_3 = arith.constant 0 : index
    %c4 = arith.constant 4 : index
    %2 = vector.load %arg1[%c0_3, %c4] : memref<1x512xf32, #tpu.memory_space<vmem>>, vector<1x1xf32>
    %c0_4 = arith.constant 0 : index
    %c1 = arith.constant 1 : index
    %3 = vector.load %arg2[%c0_4, %c1] : memref<1x128xf32, #tpu.memory_space<vmem>>, vector<1x1xf32>
    tpu.vector_store %arg2[%c0_4, %c1], %2 {strides = array<i32>} : memref<1x128xf32, #tpu.memory_space<vmem>>, vector<1x1xf32>,
    %c0_5 = arith.constant 0 : index
    %c8 = arith.constant 8 : index
    %4 = vector.load %arg1[%c0_5, %c8] : memref<1x512xf32, #tpu.memory_space<vmem>>, vector<1x1xf32>
    %c0_6 = arith.constant 0 : index
    %c2 = arith.constant 2 : index
    %5 = vector.load %arg2[%c0_6, %c2] : memref<1x128xf32, #tpu.memory_space<vmem>>, vector<1x1xf32>
    tpu.vector_store %arg2[%c0_6, %c2], %4 {strides = array<i32>} : memref<1x128xf32, #tpu.memory_space<vmem>>, vector<1x1xf32>,
    %c0_7 = arith.constant 0 : index
    %c12 = arith.constant 12 : index
    %6 = vector.load %arg1[%c0_7, %c12] : memref<1x512xf32, #tpu.memory_space<vmem>>, vector<1x1xf32>
    %c0_8 = arith.constant 0 : index
    %c3 = arith.constant 3 : index
    %7 = vector.load %arg2[%c0_8, %c3] : memref<1x128xf32, #tpu.memory_space<vmem>>, vector<1x1xf32>
    tpu.vector_store %arg2[%c0_8, %c3], %6 {strides = array<i32>} : memref<1x128xf32, #tpu.memory_space<vmem>>, vector<1x1xf32>,
    %c0_9 = arith.constant 0 : index
    %c16 = arith.constant 16 : index
    %8 = vector.load %arg1[%c0_9, %c16] : memref<1x512xf32, #tpu.memory_space<vmem>>, vector<1x1xf32>
    %c0_10 = arith.constant 0 : index
    %c4_11 = arith.constant 4 : index
    %9 = vector.load %arg2[%c0_10, %c4_11] : memref<1x128xf32, #tpu.memory_space<vmem>>, vector<1x1xf32>
    tpu.vector_store %arg2[%c0_10, %c4_11], %8 {strides = array<i32>} : memref<1x128xf32, #tpu.memory_space<vmem>>, vector<1x1xf32>,
    %c0_12 = arith.constant 0 : index
    %c20 = arith.constant 20 : index
    %10 = vector.load %arg1[%c0_12, %c20] : memref<1x512xf32, #tpu.memory_space<vmem>>, vector<1x1xf32>
    %c0_13 = arith.constant 0 : index
    %c5 = arith.constant 5 : index
    %11 = vector.load %arg2[%c0_13, %c5] : memref<1x128xf32, #tpu.memory_space<vmem>>, vector<1x1xf32>
    tpu.vector_store %arg2[%c0_13, %c5], %10 {strides = array<i32>} : memref<1x128xf32, #tpu.memory_space<vmem>>, vector<1x1xf32>,
    %c0_14 = arith.constant 0 : index
    %c24 = arith.constant 24 : index
    %12 = vector.load %arg1[%c0_14, %c24] : memref<1x512xf32, #tpu.memory_space<vmem>>, vector<1x1xf32>
    %c0_15 = arith.constant 0 : index
    %c6 = arith.constant 6 : index
    %13 = vector.load %arg2[%c0_15, %c6] : memref<1x128xf32, #tpu.memory_space<vmem>>, vector<1x1xf32>
    tpu.vector_store %arg2[%c0_15, %c6], %12 {strides = array<i32>} : memref<1x128xf32, #tpu.memory_space<vmem>>, vector<1x1xf32>,
    %c0_16 = arith.constant 0 : index
    %c28 = arith.constant 28 : index
    %14 = vector.load %arg1[%c0_16, %c28] : memref<1x512xf32, #tpu.memory_space<vmem>>, vector<1x1xf32>
    %c0_17 = arith.constant 0 : index
    %c7 = arith.constant 7 : index
    %15 = vector.load %arg2[%c0_17, %c7] : memref<1x128xf32, #tpu.memory_space<vmem>>, vector<1x1xf32>
    tpu.vector_store %arg2[%c0_17, %c7], %14 {strides = array<i32>} : memref<1x128xf32, #tpu.memory_space<vmem>>, vector<1x1xf32>,
    %c0_18 = arith.constant 0 : index
    %c32 = arith.constant 32 : index
    %16 = vector.load %arg1[%c0_18, %c32] : memref<1x512xf32, #tpu.memory_space<vmem>>, vector<1x1xf32>
    %c0_19 = arith.constant 0 : index
    %c8_20 = arith.constant 8 : index
    %17 = vector.load %arg2[%c0_19, %c8_20] : memref<1x128xf32, #tpu.memory_space<vmem>>, vector<1x1xf32>
    tpu.vector_store %arg2[%c0_19, %c8_20], %16 {strides = array<i32>} : memref<1x128xf32, #tpu.memory_space<vmem>>, vector<1x1xf32>,
    %c0_21 = arith.constant 0 : index
    %c36 = arith.constant 36 : index
    %18 = vector.load %arg1[%c0_21, %c36] : memref<1x512xf32, #tpu.memory_space<vmem>>, vector<1x1xf32>
    %c0_22 = arith.constant 0 : index
    %c9 = arith.constant 9 : index
    %19 = vector.load %arg2[%c0_22, %c9] : memref<1x128xf32, #tpu.memory_space<vmem>>, vector<1x1xf32>
    tpu.vector_store %arg2[%c0_22, %c9], %18 {strides = array<i32>} : memref<1x128xf32, #tpu.memory_space<vmem>>, vector<1x1xf32>,
    %c0_23 = arith.constant 0 : index
    %c40 = arith.constant 40 : index
    %20 = vector.load %arg1[%c0_23, %c40] : memref<1x512xf32, #tpu.memory_space<vmem>>, vector<1x1xf32>
    %c0_24 = arith.constant 0 : index
    %c10 = arith.constant 10 : index
    %21 = vector.load %arg2[%c0_24, %c10] : memref<1x128xf32, #tpu.memory_space<vmem>>, vector<1x1xf32>
    tpu.vector_store %arg2[%c0_24, %c10], %20 {strides = array<i32>} : memref<1x128xf32, #tpu.memory_space<vmem>>, vector<1x1xf32>,
    %c0_25 = arith.constant 0 : index
    %c44 = arith.constant 44 : index
    %22 = vector.load %arg1[%c0_25, %c44] : memref<1x512xf32, #tpu.memory_space<vmem>>, vector<1x1xf32>
    %c0_26 = arith.constant 0 : index
    %c11 = arith.constant 11 : index
    %23 = vector.load %arg2[%c0_26, %c11] : memref<1x128xf32, #tpu.memory_space<vmem>>, vector<1x1xf32>
    tpu.vector_store %arg2[%c0_26, %c11], %22 {strides = array<i32>} : memref<1x128xf32, #tpu.memory_space<vmem>>, vector<1x1xf32>,
    %c0_27 = arith.constant 0 : index
    %c48 = arith.constant 48 : index
    %24 = vector.load %arg1[%c0_27, %c48] : memref<1x512xf32, #tpu.memory_space<vmem>>, vector<1x1xf32>
    %c0_28 = arith.constant 0 : index
    %c12_29 = arith.constant 12 : index
    %25 = vector.load %arg2[%c0_28, %c12_29] : memref<1x128xf32, #tpu.memory_space<vmem>>, vector<1x1xf32>
    tpu.vector_store %arg2[%c0_28, %c12_29], %24 {strides = array<i32>} : memref<1x128xf32, #tpu.memory_space<vmem>>, vector<1x1xf32>,
    %c0_30 = arith.constant 0 : index
    %c52 = arith.constant 52 : index
    %26 = vector.load %arg1[%c0_30, %c52] : memref<1x512xf32, #tpu.memory_space<vmem>>, vector<1x1xf32>
    %c0_31 = arith.constant 0 : index
    %c13 = arith.constant 13 : index
    %27 = vector.load %arg2[%c0_31, %c13] : memref<1x128xf32, #tpu.memory_space<vmem>>, vector<1x1xf32>
    tpu.vector_store %arg2[%c0_31, %c13], %26 {strides = array<i32>} : memref<1x128xf32, #tpu.memory_space<vmem>>, vector<1x1xf32>,
    %c0_32 = arith.constant 0 : index
    %c56 = arith.constant 56 : index
    %28 = vector.load %arg1[%c0_32, %c56] : memref<1x512xf32, #tpu.memory_space<vmem>>, vector<1x1xf32>
    %c0_33 = arith.constant 0 : index
    %c14 = arith.constant 14 : index
    %29 = vector.load %arg2[%c0_33, %c14] : memref<1x128xf32, #tpu.memory_space<vmem>>, vector<1x1xf32>
    tpu.vector_store %arg2[%c0_33, %c14], %28 {strides = array<i32>} : memref<1x128xf32, #tpu.memory_space<vmem>>, vector<1x1xf32>,
    %c0_34 = arith.constant 0 : index
    %c60 = arith.constant 60 : index
    %30 = vector.load %arg1[%c0_34, %c60] : memref<1x512xf32, #tpu.memory_space<vmem>>, vector<1x1xf32>
    %c0_35 = arith.constant 0 : index
    %c15 = arith.constant 15 : index
    %31 = vector.load %arg2[%c0_35, %c15] : memref<1x128xf32, #tpu.memory_space<vmem>>, vector<1x1xf32>
    tpu.vector_store %arg2[%c0_35, %c15], %30 {strides = array<i32>} : memref<1x128xf32, #tpu.memory_space<vmem>>, vector<1x1xf32>,
    %c0_36 = arith.constant 0 : index
    %c64 = arith.constant 64 : index
    %32 = vector.load %arg1[%c0_36, %c64] : memref<1x512xf32, #tpu.memory_space<vmem>>, vector<1x1xf32>
    %c0_37 = arith.constant 0 : index
    %c16_38 = arith.constant 16 : index
    %33 = vector.load %arg2[%c0_37, %c16_38] : memref<1x128xf32, #tpu.memory_space<vmem>>, vector<1x1xf32>
    tpu.vector_store %arg2[%c0_37, %c16_38], %32 {strides = array<i32>} : memref<1x128xf32, #tpu.memory_space<vmem>>, vector<1x1xf32>,
    %c0_39 = arith.constant 0 : index
    %c68 = arith.constant 68 : index
    %34 = vector.load %arg1[%c0_39, %c68] : memref<1x512xf32, #tpu.memory_space<vmem>>, vector<1x1xf32>
    %c0_40 = arith.constant 0 : index
    %c17 = arith.constant 17 : index
    %35 = vector.load %arg2[%c0_40, %c17] : memref<1x128xf32, #tpu.memory_space<vmem>>, vector<1x1xf32>
    tpu.vector_store %arg2[%c0_40, %c17], %34 {strides = array<i32>} : memref<1x128xf32, #tpu.memory_space<vmem>>, vector<1x1xf32>,
    %c0_41 = arith.constant 0 : index
    %c72 = arith.constant 72 : index
    %36 = vector.load %arg1[%c0_41, %c72] : memref<1x512xf32, #tpu.memory_space<vmem>>, vector<1x1xf32>
    %c0_42 = arith.constant 0 : index
    %c18 = arith.constant 18 : index
    %37 = vector.load %arg2[%c0_42, %c18] : memref<1x128xf32, #tpu.memory_space<vmem>>, vector<1x1xf32>
    tpu.vector_store %arg2[%c0_42, %c18], %36 {strides = array<i32>} : memref<1x128xf32, #tpu.memory_space<vmem>>, vector<1x1xf32>,
    %c0_43 = arith.constant 0 : index
    %c76 = arith.constant 76 : index
    %38 = vector.load %arg1[%c0_43, %c76] : memref<1x512xf32, #tpu.memory_space<vmem>>, vector<1x1xf32>
    %c0_44 = arith.constant 0 : index
    %c19 = arith.constant 19 : index
    %39 = vector.load %arg2[%c0_44, %c19] : memref<1x128xf32, #tpu.memory_space<vmem>>, vector<1x1xf32>
    tpu.vector_store %arg2[%c0_44, %c19], %38 {strides = array<i32>} : memref<1x128xf32, #tpu.memory_space<vmem>>, vector<1x1xf32>,
    %c0_45 = arith.constant 0 : index
    %c80 = arith.constant 80 : index
    %40 = vector.load %arg1[%c0_45, %c80] : memref<1x512xf32, #tpu.memory_space<vmem>>, vector<1x1xf32>
    %c0_46 = arith.constant 0 : index
    %c20_47 = arith.constant 20 : index
    %41 = vector.load %arg2[%c0_46, %c20_47] : memref<1x128xf32, #tpu.memory_space<vmem>>, vector<1x1xf32>
    tpu.vector_store %arg2[%c0_46, %c20_47], %40 {strides = array<i32>} : memref<1x128xf32, #tpu.memory_space<vmem>>, vector<1x1xf32>,
    %c0_48 = arith.constant 0 : index
    %c84 = arith.constant 84 : index
    %42 = vector.load %arg1[%c0_48, %c84] : memref<1x512xf32, #tpu.memory_space<vmem>>, vector<1x1xf32>
    %c0_49 = arith.constant 0 : index
    %c21 = arith.constant 21 : index
    %43 = vector.load %arg2[%c0_49, %c21] : memref<1x128xf32, #tpu.memory_space<vmem>>, vector<1x1xf32>
    tpu.vector_store %arg2[%c0_49, %c21], %42 {strides = array<i32>} : memref<1x128xf32, #tpu.memory_space<vmem>>, vector<1x1xf32>,
    %c0_50 = arith.constant 0 : index
    %c88 = arith.constant 88 : index
    %44 = vector.load %arg1[%c0_50, %c88] : memref<1x512xf32, #tpu.memory_space<vmem>>, vector<1x1xf32>
    %c0_51 = arith.constant 0 : index
    %c22 = arith.constant 22 : index
    %45 = vector.load %arg2[%c0_51, %c22] : memref<1x128xf32, #tpu.memory_space<vmem>>, vector<1x1xf32>
    tpu.vector_store %arg2[%c0_51, %c22], %44 {strides = array<i32>} : memref<1x128xf32, #tpu.memory_space<vmem>>, vector<1x1xf32>,
    %c0_52 = arith.constant 0 : index
    %c92 = arith.constant 92 : index
    %46 = vector.load %arg1[%c0_52, %c92] : memref<1x512xf32, #tpu.memory_space<vmem>>, vector<1x1xf32>
    %c0_53 = arith.constant 0 : index
    %c23 = arith.constant 23 : index
    %47 = vector.load %arg2[%c0_53, %c23] : memref<1x128xf32, #tpu.memory_space<vmem>>, vector<1x1xf32>
    tpu.vector_store %arg2[%c0_53, %c23], %46 {strides = array<i32>} : memref<1x128xf32, #tpu.memory_space<vmem>>, vector<1x1xf32>,
    %c0_54 = arith.constant 0 : index
    %c96 = arith.constant 96 : index
    %48 = vector.load %arg1[%c0_54, %c96] : memref<1x512xf32, #tpu.memory_space<vmem>>, vector<1x1xf32>
    %c0_55 = arith.constant 0 : index
    %c24_56 = arith.constant 24 : index
    %49 = vector.load %arg2[%c0_55, %c24_56] : memref<1x128xf32, #tpu.memory_space<vmem>>, vector<1x1xf32>
    tpu.vector_store %arg2[%c0_55, %c24_56], %48 {strides = array<i32>} : memref<1x128xf32, #tpu.memory_space<vmem>>, vector<1x1xf32>,
    %c0_57 = arith.constant 0 : index
    %c100 = arith.constant 100 : index
    %50 = vector.load %arg1[%c0_57, %c100] : memref<1x512xf32, #tpu.memory_space<vmem>>, vector<1x1xf32>
    %c0_58 = arith.constant 0 : index
    %c25 = arith.constant 25 : index
    %51 = vector.load %arg2[%c0_58, %c25] : memref<1x128xf32, #tpu.memory_space<vmem>>, vector<1x1xf32>
    tpu.vector_store %arg2[%c0_58, %c25], %50 {strides = array<i32>} : memref<1x128xf32, #tpu.memory_space<vmem>>, vector<1x1xf32>,
    %c0_59 = arith.constant 0 : index
    %c104 = arith.constant 104 : index
    %52 = vector.load %arg1[%c0_59, %c104] : memref<1x512xf32, #tpu.memory_space<vmem>>, vector<1x1xf32>
    %c0_60 = arith.constant 0 : index
    %c26 = arith.constant 26 : index
    %53 = vector.load %arg2[%c0_60, %c26] : memref<1x128xf32, #tpu.memory_space<vmem>>, vector<1x1xf32>
    tpu.vector_store %arg2[%c0_60, %c26], %52 {strides = array<i32>} : memref<1x128xf32, #tpu.memory_space<vmem>>, vector<1x1xf32>,
    %c0_61 = arith.constant 0 : index
    %c108 = arith.constant 108 : index
    %54 = vector.load %arg1[%c0_61, %c108] : memref<1x512xf32, #tpu.memory_space<vmem>>, vector<1x1xf32>
    %c0_62 = arith.constant 0 : index
    %c27 = arith.constant 27 : index
    %55 = vector.load %arg2[%c0_62, %c27] : memref<1x128xf32, #tpu.memory_space<vmem>>, vector<1x1xf32>
    tpu.vector_store %arg2[%c0_62, %c27], %54 {strides = array<i32>} : memref<1x128xf32, #tpu.memory_space<vmem>>, vector<1x1xf32>,
    %c0_63 = arith.constant 0 : index
    %c112 = arith.constant 112 : index
    %56 = vector.load %arg1[%c0_63, %c112] : memref<1x512xf32, #tpu.memory_space<vmem>>, vector<1x1xf32>
    %c0_64 = arith.constant 0 : index
    %c28_65 = arith.constant 28 : index
    %57 = vector.load %arg2[%c0_64, %c28_65] : memref<1x128xf32, #tpu.memory_space<vmem>>, vector<1x1xf32>
    tpu.vector_store %arg2[%c0_64, %c28_65], %56 {strides = array<i32>} : memref<1x128xf32, #tpu.memory_space<vmem>>, vector<1x1xf32>,
    %c0_66 = arith.constant 0 : index
    %c116 = arith.constant 116 : index
    %58 = vector.load %arg1[%c0_66, %c116] : memref<1x512xf32, #tpu.memory_space<vmem>>, vector<1x1xf32>
    %c0_67 = arith.constant 0 : index
    %c29 = arith.constant 29 : index
    %59 = vector.load %arg2[%c0_67, %c29] : memref<1x128xf32, #tpu.memory_space<vmem>>, vector<1x1xf32>
    tpu.vector_store %arg2[%c0_67, %c29], %58 {strides = array<i32>} : memref<1x128xf32, #tpu.memory_space<vmem>>, vector<1x1xf32>,
    %c0_68 = arith.constant 0 : index
    %c120 = arith.constant 120 : index
    %60 = vector.load %arg1[%c0_68, %c120] : memref<1x512xf32, #tpu.memory_space<vmem>>, vector<1x1xf32>
    %c0_69 = arith.constant 0 : index
    %c30 = arith.constant 30 : index
    %61 = vector.load %arg2[%c0_69, %c30] : memref<1x128xf32, #tpu.memory_space<vmem>>, vector<1x1xf32>
    tpu.vector_store %arg2[%c0_69, %c30], %60 {strides = array<i32>} : memref<1x128xf32, #tpu.memory_space<vmem>>, vector<1x1xf32>,
    %c0_70 = arith.constant 0 : index
    %c124 = arith.constant 124 : index
    %62 = vector.load %arg1[%c0_70, %c124] : memref<1x512xf32, #tpu.memory_space<vmem>>, vector<1x1xf32>
    %c0_71 = arith.constant 0 : index
    %c31 = arith.constant 31 : index
    %63 = vector.load %arg2[%c0_71, %c31] : memref<1x128xf32, #tpu.memory_space<vmem>>, vector<1x1xf32>
    tpu.vector_store %arg2[%c0_71, %c31], %62 {strides = array<i32>} : memref<1x128xf32, #tpu.memory_space<vmem>>, vector<1x1xf32>,
    %c0_72 = arith.constant 0 : index
    %c128 = arith.constant 128 : index
    %64 = vector.load %arg1[%c0_72, %c128] : memref<1x512xf32, #tpu.memory_space<vmem>>, vector<1x1xf32>
    %c0_73 = arith.constant 0 : index
    %c32_74 = arith.constant 32 : index
    %65 = vector.load %arg2[%c0_73, %c32_74] : memref<1x128xf32, #tpu.memory_space<vmem>>, vector<1x1xf32>
    tpu.vector_store %arg2[%c0_73, %c32_74], %64 {strides = array<i32>} : memref<1x128xf32, #tpu.memory_space<vmem>>, vector<1x1xf32>,
    %c0_75 = arith.constant 0 : index
    %c132 = arith.constant 132 : index
    %66 = vector.load %arg1[%c0_75, %c132] : memref<1x512xf32, #tpu.memory_space<vmem>>, vector<1x1xf32>
    %c0_76 = arith.constant 0 : index
    %c33 = arith.constant 33 : index
    %67 = vector.load %arg2[%c0_76, %c33] : memref<1x128xf32, #tpu.memory_space<vmem>>, vector<1x1xf32>
    tpu.vector_store %arg2[%c0_76, %c33], %66 {strides = array<i32>} : memref<1x128xf32, #tpu.memory_space<vmem>>, vector<1x1xf32>,
    %c0_77 = arith.constant 0 : index
    %c136 = arith.constant 136 : index
    %68 = vector.load %arg1[%c0_77, %c136] : memref<1x512xf32, #tpu.memory_space<vmem>>, vector<1x1xf32>
    %c0_78 = arith.constant 0 : index
    %c34 = arith.constant 34 : index
    %69 = vector.load %arg2[%c0_78, %c34] : memref<1x128xf32, #tpu.memory_space<vmem>>, vector<1x1xf32>
    tpu.vector_store %arg2[%c0_78, %c34], %68 {strides = array<i32>} : memref<1x128xf32, #tpu.memory_space<vmem>>, vector<1x1xf32>,
    %c0_79 = arith.constant 0 : index
    %c140 = arith.constant 140 : index
    %70 = vector.load %arg1[%c0_79, %c140] : memref<1x512xf32, #tpu.memory_space<vmem>>, vector<1x1xf32>
    %c0_80 = arith.constant 0 : index
    %c35 = arith.constant 35 : index
    %71 = vector.load %arg2[%c0_80, %c35] : memref<1x128xf32, #tpu.memory_space<vmem>>, vector<1x1xf32>
    tpu.vector_store %arg2[%c0_80, %c35], %70 {strides = array<i32>} : memref<1x128xf32, #tpu.memory_space<vmem>>, vector<1x1xf32>,
    %c0_81 = arith.constant 0 : index
    %c144 = arith.constant 144 : index
    %72 = vector.load %arg1[%c0_81, %c144] : memref<1x512xf32, #tpu.memory_space<vmem>>, vector<1x1xf32>
    %c0_82 = arith.constant 0 : index
    %c36_83 = arith.constant 36 : index
    %73 = vector.load %arg2[%c0_82, %c36_83] : memref<1x128xf32, #tpu.memory_space<vmem>>, vector<1x1xf32>
    tpu.vector_store %arg2[%c0_82, %c36_83], %72 {strides = array<i32>} : memref<1x128xf32, #tpu.memory_space<vmem>>, vector<1x1xf32>,
    %c0_84 = arith.constant 0 : index
    %c148 = arith.constant 148 : index
    %74 = vector.load %arg1[%c0_84, %c148] : memref<1x512xf32, #tpu.memory_space<vmem>>, vector<1x1xf32>
    %c0_85 = arith.constant 0 : index
    %c37 = arith.constant 37 : index
    %75 = vector.load %arg2[%c0_85, %c37] : memref<1x128xf32, #tpu.memory_space<vmem>>, vector<1x1xf32>
    tpu.vector_store %arg2[%c0_85, %c37], %74 {strides = array<i32>} : memref<1x128xf32, #tpu.memory_space<vmem>>, vector<1x1xf32>,
    %c0_86 = arith.constant 0 : index
    %c152 = arith.constant 152 : index
    %76 = vector.load %arg1[%c0_86, %c152] : memref<1x512xf32, #tpu.memory_space<vmem>>, vector<1x1xf32>
    %c0_87 = arith.constant 0 : index
    %c38 = arith.constant 38 : index
    %77 = vector.load %arg2[%c0_87, %c38] : memref<1x128xf32, #tpu.memory_space<vmem>>, vector<1x1xf32>
    tpu.vector_store %arg2[%c0_87, %c38], %76 {strides = array<i32>} : memref<1x128xf32, #tpu.memory_space<vmem>>, vector<1x1xf32>,
    %c0_88 = arith.constant 0 : index
    %c156 = arith.constant 156 : index
    %78 = vector.load %arg1[%c0_88, %c156] : memref<1x512xf32, #tpu.memory_space<vmem>>, vector<1x1xf32>
    %c0_89 = arith.constant 0 : index
    %c39 = arith.constant 39 : index
    %79 = vector.load %arg2[%c0_89, %c39] : memref<1x128xf32, #tpu.memory_space<vmem>>, vector<1x1xf32>
    tpu.vector_store %arg2[%c0_89, %c39], %78 {strides = array<i32>} : memref<1x128xf32, #tpu.memory_space<vmem>>, vector<1x1xf32>,
    %c0_90 = arith.constant 0 : index
    %c160 = arith.constant 160 : index
    %80 = vector.load %arg1[%c0_90, %c160] : memref<1x512xf32, #tpu.memory_space<vmem>>, vector<1x1xf32>
    %c0_91 = arith.constant 0 : index
    %c40_92 = arith.constant 40 : index
    %81 = vector.load %arg2[%c0_91, %c40_92] : memref<1x128xf32, #tpu.memory_space<vmem>>, vector<1x1xf32>
    tpu.vector_store %arg2[%c0_91, %c40_92], %80 {strides = array<i32>} : memref<1x128xf32, #tpu.memory_space<vmem>>, vector<1x1xf32>,
    %c0_93 = arith.constant 0 : index
    %c164 = arith.constant 164 : index
    %82 = vector.load %arg1[%c0_93, %c164] : memref<1x512xf32, #tpu.memory_space<vmem>>, vector<1x1xf32>
    %c0_94 = arith.constant 0 : index
    %c41 = arith.constant 41 : index
    %83 = vector.load %arg2[%c0_94, %c41] : memref<1x128xf32, #tpu.memory_space<vmem>>, vector<1x1xf32>
    tpu.vector_store %arg2[%c0_94, %c41], %82 {strides = array<i32>} : memref<1x128xf32, #tpu.memory_space<vmem>>, vector<1x1xf32>,
    %c0_95 = arith.constant 0 : index
    %c168 = arith.constant 168 : index
    %84 = vector.load %arg1[%c0_95, %c168] : memref<1x512xf32, #tpu.memory_space<vmem>>, vector<1x1xf32>
    %c0_96 = arith.constant 0 : index
    %c42 = arith.constant 42 : index
    %85 = vector.load %arg2[%c0_96, %c42] : memref<1x128xf32, #tpu.memory_space<vmem>>, vector<1x1xf32>
    tpu.vector_store %arg2[%c0_96, %c42], %84 {strides = array<i32>} : memref<1x128xf32, #tpu.memory_space<vmem>>, vector<1x1xf32>,
    %c0_97 = arith.constant 0 : index
    %c172 = arith.constant 172 : index
    %86 = vector.load %arg1[%c0_97, %c172] : memref<1x512xf32, #tpu.memory_space<vmem>>, vector<1x1xf32>
    %c0_98 = arith.constant 0 : index
    %c43 = arith.constant 43 : index
    %87 = vector.load %arg2[%c0_98, %c43] : memref<1x128xf32, #tpu.memory_space<vmem>>, vector<1x1xf32>
    tpu.vector_store %arg2[%c0_98, %c43], %86 {strides = array<i32>} : memref<1x128xf32, #tpu.memory_space<vmem>>, vector<1x1xf32>,
    %c0_99 = arith.constant 0 : index
    %c176 = arith.constant 176 : index
    %88 = vector.load %arg1[%c0_99, %c176] : memref<1x512xf32, #tpu.memory_space<vmem>>, vector<1x1xf32>
    %c0_100 = arith.constant 0 : index
    %c44_101 = arith.constant 44 : index
    %89 = vector.load %arg2[%c0_100, %c44_101] : memref<1x128xf32, #tpu.memory_space<vmem>>, vector<1x1xf32>
    tpu.vector_store %arg2[%c0_100, %c44_101], %88 {strides = array<i32>} : memref<1x128xf32, #tpu.memory_space<vmem>>, vector<1x1xf32>,
    %c0_102 = arith.constant 0 : index
    %c180 = arith.constant 180 : index
    %90 = vector.load %arg1[%c0_102, %c180] : memref<1x512xf32, #tpu.memory_space<vmem>>, vector<1x1xf32>
    %c0_103 = arith.constant 0 : index
    %c45 = arith.constant 45 : index
    %91 = vector.load %arg2[%c0_103, %c45] : memref<1x128xf32, #tpu.memory_space<vmem>>, vector<1x1xf32>
    tpu.vector_store %arg2[%c0_103, %c45], %90 {strides = array<i32>} : memref<1x128xf32, #tpu.memory_space<vmem>>, vector<1x1xf32>,
    %c0_104 = arith.constant 0 : index
    %c184 = arith.constant 184 : index
    %92 = vector.load %arg1[%c0_104, %c184] : memref<1x512xf32, #tpu.memory_space<vmem>>, vector<1x1xf32>
    %c0_105 = arith.constant 0 : index
    %c46 = arith.constant 46 : index
    %93 = vector.load %arg2[%c0_105, %c46] : memref<1x128xf32, #tpu.memory_space<vmem>>, vector<1x1xf32>
    tpu.vector_store %arg2[%c0_105, %c46], %92 {strides = array<i32>} : memref<1x128xf32, #tpu.memory_space<vmem>>, vector<1x1xf32>,
    %c0_106 = arith.constant 0 : index
    %c188 = arith.constant 188 : index
    %94 = vector.load %arg1[%c0_106, %c188] : memref<1x512xf32, #tpu.memory_space<vmem>>, vector<1x1xf32>
    %c0_107 = arith.constant 0 : index
    %c47 = arith.constant 47 : index
    %95 = vector.load %arg2[%c0_107, %c47] : memref<1x128xf32, #tpu.memory_space<vmem>>, vector<1x1xf32>
    tpu.vector_store %arg2[%c0_107, %c47], %94 {strides = array<i32>} : memref<1x128xf32, #tpu.memory_space<vmem>>, vector<1x1xf32>,
    %c0_108 = arith.constant 0 : index
    %c192 = arith.constant 192 : index
    %96 = vector.load %arg1[%c0_108, %c192] : memref<1x512xf32, #tpu.memory_space<vmem>>, vector<1x1xf32>
    %c0_109 = arith.constant 0 : index
    %c48_110 = arith.constant 48 : index
    %97 = vector.load %arg2[%c0_109, %c48_110] : memref<1x128xf32, #tpu.memory_space<vmem>>, vector<1x1xf32>
    tpu.vector_store %arg2[%c0_109, %c48_110], %96 {strides = array<i32>} : memref<1x128xf32, #tpu.memory_space<vmem>>, vector<1x1xf32>,
    %c0_111 = arith.constant 0 : index
    %c196 = arith.constant 196 : index
    %98 = vector.load %arg1[%c0_111, %c196] : memref<1x512xf32, #tpu.memory_space<vmem>>, vector<1x1xf32>
    %c0_112 = arith.constant 0 : index
    %c49 = arith.constant 49 : index
    %99 = vector.load %arg2[%c0_112, %c49] : memref<1x128xf32, #tpu.memory_space<vmem>>, vector<1x1xf32>
    tpu.vector_store %arg2[%c0_112, %c49], %98 {strides = array<i32>} : memref<1x128xf32, #tpu.memory_space<vmem>>, vector<1x1xf32>,
    %c0_113 = arith.constant 0 : index
    %c200 = arith.constant 200 : index
    %100 = vector.load %arg1[%c0_113, %c200] : memref<1x512xf32, #tpu.memory_space<vmem>>, vector<1x1xf32>
    %c0_114 = arith.constant 0 : index
    %c50 = arith.constant 50 : index
    %101 = vector.load %arg2[%c0_114, %c50] : memref<1x128xf32, #tpu.memory_space<vmem>>, vector<1x1xf32>
    tpu.vector_store %arg2[%c0_114, %c50], %100 {strides = array<i32>} : memref<1x128xf32, #tpu.memory_space<vmem>>, vector<1x1xf32>,
    %c0_115 = arith.constant 0 : index
    %c204 = arith.constant 204 : index
    %102 = vector.load %arg1[%c0_115, %c204] : memref<1x512xf32, #tpu.memory_space<vmem>>, vector<1x1xf32>
    %c0_116 = arith.constant 0 : index
    %c51 = arith.constant 51 : index
    %103 = vector.load %arg2[%c0_116, %c51] : memref<1x128xf32, #tpu.memory_space<vmem>>, vector<1x1xf32>
    tpu.vector_store %arg2[%c0_116, %c51], %102 {strides = array<i32>} : memref<1x128xf32, #tpu.memory_space<vmem>>, vector<1x1xf32>,
    %c0_117 = arith.constant 0 : index
    %c208 = arith.constant 208 : index
    %104 = vector.load %arg1[%c0_117, %c208] : memref<1x512xf32, #tpu.memory_space<vmem>>, vector<1x1xf32>
    %c0_118 = arith.constant 0 : index
    %c52_119 = arith.constant 52 : index
    %105 = vector.load %arg2[%c0_118, %c52_119] : memref<1x128xf32, #tpu.memory_space<vmem>>, vector<1x1xf32>
    tpu.vector_store %arg2[%c0_118, %c52_119], %104 {strides = array<i32>} : memref<1x128xf32, #tpu.memory_space<vmem>>, vector<1x1xf32>,
    %c0_120 = arith.constant 0 : index
    %c212 = arith.constant 212 : index
    %106 = vector.load %arg1[%c0_120, %c212] : memref<1x512xf32, #tpu.memory_space<vmem>>, vector<1x1xf32>
    %c0_121 = arith.constant 0 : index
    %c53 = arith.constant 53 : index
    %107 = vector.load %arg2[%c0_121, %c53] : memref<1x128xf32, #tpu.memory_space<vmem>>, vector<1x1xf32>
    tpu.vector_store %arg2[%c0_121, %c53], %106 {strides = array<i32>} : memref<1x128xf32, #tpu.memory_space<vmem>>, vector<1x1xf32>,
    %c0_122 = arith.constant 0 : index
    %c216 = arith.constant 216 : index
    %108 = vector.load %arg1[%c0_122, %c216] : memref<1x512xf32, #tpu.memory_space<vmem>>, vector<1x1xf32>
    %c0_123 = arith.constant 0 : index
    %c54 = arith.constant 54 : index
    %109 = vector.load %arg2[%c0_123, %c54] : memref<1x128xf32, #tpu.memory_space<vmem>>, vector<1x1xf32>
    tpu.vector_store %arg2[%c0_123, %c54], %108 {strides = array<i32>} : memref<1x128xf32, #tpu.memory_space<vmem>>, vector<1x1xf32>,
    %c0_124 = arith.constant 0 : index
    %c220 = arith.constant 220 : index
    %110 = vector.load %arg1[%c0_124, %c220] : memref<1x512xf32, #tpu.memory_space<vmem>>, vector<1x1xf32>
    %c0_125 = arith.constant 0 : index
    %c55 = arith.constant 55 : index
    %111 = vector.load %arg2[%c0_125, %c55] : memref<1x128xf32, #tpu.memory_space<vmem>>, vector<1x1xf32>
    tpu.vector_store %arg2[%c0_125, %c55], %110 {strides = array<i32>} : memref<1x128xf32, #tpu.memory_space<vmem>>, vector<1x1xf32>,
    %c0_126 = arith.constant 0 : index
    %c224 = arith.constant 224 : index
    %112 = vector.load %arg1[%c0_126, %c224] : memref<1x512xf32, #tpu.memory_space<vmem>>, vector<1x1xf32>
    %c0_127 = arith.constant 0 : index
    %c56_128 = arith.constant 56 : index
    %113 = vector.load %arg2[%c0_127, %c56_128] : memref<1x128xf32, #tpu.memory_space<vmem>>, vector<1x1xf32>
    tpu.vector_store %arg2[%c0_127, %c56_128], %112 {strides = array<i32>} : memref<1x128xf32, #tpu.memory_space<vmem>>, vector<1x1xf32>,
    %c0_129 = arith.constant 0 : index
    %c228 = arith.constant 228 : index
    %114 = vector.load %arg1[%c0_129, %c228] : memref<1x512xf32, #tpu.memory_space<vmem>>, vector<1x1xf32>
    %c0_130 = arith.constant 0 : index
    %c57 = arith.constant 57 : index
    %115 = vector.load %arg2[%c0_130, %c57] : memref<1x128xf32, #tpu.memory_space<vmem>>, vector<1x1xf32>
    tpu.vector_store %arg2[%c0_130, %c57], %114 {strides = array<i32>} : memref<1x128xf32, #tpu.memory_space<vmem>>, vector<1x1xf32>,
    %c0_131 = arith.constant 0 : index
    %c232 = arith.constant 232 : index
    %116 = vector.load %arg1[%c0_131, %c232] : memref<1x512xf32, #tpu.memory_space<vmem>>, vector<1x1xf32>
    %c0_132 = arith.constant 0 : index
    %c58 = arith.constant 58 : index
    %117 = vector.load %arg2[%c0_132, %c58] : memref<1x128xf32, #tpu.memory_space<vmem>>, vector<1x1xf32>
    tpu.vector_store %arg2[%c0_132, %c58], %116 {strides = array<i32>} : memref<1x128xf32, #tpu.memory_space<vmem>>, vector<1x1xf32>,
    %c0_133 = arith.constant 0 : index
    %c236 = arith.constant 236 : index
    %118 = vector.load %arg1[%c0_133, %c236] : memref<1x512xf32, #tpu.memory_space<vmem>>, vector<1x1xf32>
    %c0_134 = arith.constant 0 : index
    %c59 = arith.constant 59 : index
    %119 = vector.load %arg2[%c0_134, %c59] : memref<1x128xf32, #tpu.memory_space<vmem>>, vector<1x1xf32>
    tpu.vector_store %arg2[%c0_134, %c59], %118 {strides = array<i32>} : memref<1x128xf32, #tpu.memory_space<vmem>>, vector<1x1xf32>,
    %c0_135 = arith.constant 0 : index
    %c240 = arith.constant 240 : index
    %120 = vector.load %arg1[%c0_135, %c240] : memref<1x512xf32, #tpu.memory_space<vmem>>, vector<1x1xf32>
    %c0_136 = arith.constant 0 : index
    %c60_137 = arith.constant 60 : index
    %121 = vector.load %arg2[%c0_136, %c60_137] : memref<1x128xf32, #tpu.memory_space<vmem>>, vector<1x1xf32>
    tpu.vector_store %arg2[%c0_136, %c60_137], %120 {strides = array<i32>} : memref<1x128xf32, #tpu.memory_space<vmem>>, vector<1x1xf32>,
    %c0_138 = arith.constant 0 : index
    %c244 = arith.constant 244 : index
    %122 = vector.load %arg1[%c0_138, %c244] : memref<1x512xf32, #tpu.memory_space<vmem>>, vector<1x1xf32>
    %c0_139 = arith.constant 0 : index
    %c61 = arith.constant 61 : index
    %123 = vector.load %arg2[%c0_139, %c61] : memref<1x128xf32, #tpu.memory_space<vmem>>, vector<1x1xf32>
    tpu.vector_store %arg2[%c0_139, %c61], %122 {strides = array<i32>} : memref<1x128xf32, #tpu.memory_space<vmem>>, vector<1x1xf32>,
    %c0_140 = arith.constant 0 : index
    %c248 = arith.constant 248 : index
    %124 = vector.load %arg1[%c0_140, %c248] : memref<1x512xf32, #tpu.memory_space<vmem>>, vector<1x1xf32>
    %c0_141 = arith.constant 0 : index
    %c62 = arith.constant 62 : index
    %125 = vector.load %arg2[%c0_141, %c62] : memref<1x128xf32, #tpu.memory_space<vmem>>, vector<1x1xf32>
    tpu.vector_store %arg2[%c0_141, %c62], %124 {strides = array<i32>} : memref<1x128xf32, #tpu.memory_space<vmem>>, vector<1x1xf32>,
    %c0_142 = arith.constant 0 : index
    %c252 = arith.constant 252 : index
    %126 = vector.load %arg1[%c0_142, %c252] : memref<1x512xf32, #tpu.memory_space<vmem>>, vector<1x1xf32>
    %c0_143 = arith.constant 0 : index
    %c63 = arith.constant 63 : index
    %127 = vector.load %arg2[%c0_143, %c63] : memref<1x128xf32, #tpu.memory_space<vmem>>, vector<1x1xf32>
    tpu.vector_store %arg2[%c0_143, %c63], %126 {strides = array<i32>} : memref<1x128xf32, #tpu.memory_space<vmem>>, vector<1x1xf32>,
    %c0_144 = arith.constant 0 : index
    %c256 = arith.constant 256 : index
    %128 = vector.load %arg1[%c0_144, %c256] : memref<1x512xf32, #tpu.memory_space<vmem>>, vector<1x1xf32>
    %c0_145 = arith.constant 0 : index
    %c64_146 = arith.constant 64 : index
    %129 = vector.load %arg2[%c0_145, %c64_146] : memref<1x128xf32, #tpu.memory_space<vmem>>, vector<1x1xf32>
    tpu.vector_store %arg2[%c0_145, %c64_146], %128 {strides = array<i32>} : memref<1x128xf32, #tpu.memory_space<vmem>>, vector<1x1xf32>,
    %c0_147 = arith.constant 0 : index
    %c260 = arith.constant 260 : index
    %130 = vector.load %arg1[%c0_147, %c260] : memref<1x512xf32, #tpu.memory_space<vmem>>, vector<1x1xf32>
    %c0_148 = arith.constant 0 : index
    %c65 = arith.constant 65 : index
    %131 = vector.load %arg2[%c0_148, %c65] : memref<1x128xf32, #tpu.memory_space<vmem>>, vector<1x1xf32>
    tpu.vector_store %arg2[%c0_148, %c65], %130 {strides = array<i32>} : memref<1x128xf32, #tpu.memory_space<vmem>>, vector<1x1xf32>,
    %c0_149 = arith.constant 0 : index
    %c264 = arith.constant 264 : index
    %132 = vector.load %arg1[%c0_149, %c264] : memref<1x512xf32, #tpu.memory_space<vmem>>, vector<1x1xf32>
    %c0_150 = arith.constant 0 : index
    %c66 = arith.constant 66 : index
    %133 = vector.load %arg2[%c0_150, %c66] : memref<1x128xf32, #tpu.memory_space<vmem>>, vector<1x1xf32>
    tpu.vector_store %arg2[%c0_150, %c66], %132 {strides = array<i32>} : memref<1x128xf32, #tpu.memory_space<vmem>>, vector<1x1xf32>,
    %c0_151 = arith.constant 0 : index
    %c268 = arith.constant 268 : index
    %134 = vector.load %arg1[%c0_151, %c268] : memref<1x512xf32, #tpu.memory_space<vmem>>, vector<1x1xf32>
    %c0_152 = arith.constant 0 : index
    %c67 = arith.constant 67 : index
    %135 = vector.load %arg2[%c0_152, %c67] : memref<1x128xf32, #tpu.memory_space<vmem>>, vector<1x1xf32>
    tpu.vector_store %arg2[%c0_152, %c67], %134 {strides = array<i32>} : memref<1x128xf32, #tpu.memory_space<vmem>>, vector<1x1xf32>,
    %c0_153 = arith.constant 0 : index
    %c272 = arith.constant 272 : index
    %136 = vector.load %arg1[%c0_153, %c272] : memref<1x512xf32, #tpu.memory_space<vmem>>, vector<1x1xf32>
    %c0_154 = arith.constant 0 : index
    %c68_155 = arith.constant 68 : index
    %137 = vector.load %arg2[%c0_154, %c68_155] : memref<1x128xf32, #tpu.memory_space<vmem>>, vector<1x1xf32>
    tpu.vector_store %arg2[%c0_154, %c68_155], %136 {strides = array<i32>} : memref<1x128xf32, #tpu.memory_space<vmem>>, vector<1x1xf32>,
    %c0_156 = arith.constant 0 : index
    %c276 = arith.constant 276 : index
    %138 = vector.load %arg1[%c0_156, %c276] : memref<1x512xf32, #tpu.memory_space<vmem>>, vector<1x1xf32>
    %c0_157 = arith.constant 0 : index
    %c69 = arith.constant 69 : index
    %139 = vector.load %arg2[%c0_157, %c69] : memref<1x128xf32, #tpu.memory_space<vmem>>, vector<1x1xf32>
    tpu.vector_store %arg2[%c0_157, %c69], %138 {strides = array<i32>} : memref<1x128xf32, #tpu.memory_space<vmem>>, vector<1x1xf32>,
    %c0_158 = arith.constant 0 : index
    %c280 = arith.constant 280 : index
    %140 = vector.load %arg1[%c0_158, %c280] : memref<1x512xf32, #tpu.memory_space<vmem>>, vector<1x1xf32>
    %c0_159 = arith.constant 0 : index
    %c70 = arith.constant 70 : index
    %141 = vector.load %arg2[%c0_159, %c70] : memref<1x128xf32, #tpu.memory_space<vmem>>, vector<1x1xf32>
    tpu.vector_store %arg2[%c0_159, %c70], %140 {strides = array<i32>} : memref<1x128xf32, #tpu.memory_space<vmem>>, vector<1x1xf32>,
    %c0_160 = arith.constant 0 : index
    %c284 = arith.constant 284 : index
    %142 = vector.load %arg1[%c0_160, %c284] : memref<1x512xf32, #tpu.memory_space<vmem>>, vector<1x1xf32>
    %c0_161 = arith.constant 0 : index
    %c71 = arith.constant 71 : index
    %143 = vector.load %arg2[%c0_161, %c71] : memref<1x128xf32, #tpu.memory_space<vmem>>, vector<1x1xf32>
    tpu.vector_store %arg2[%c0_161, %c71], %142 {strides = array<i32>} : memref<1x128xf32, #tpu.memory_space<vmem>>, vector<1x1xf32>,
    %c0_162 = arith.constant 0 : index
    %c288 = arith.constant 288 : index
    %144 = vector.load %arg1[%c0_162, %c288] : memref<1x512xf32, #tpu.memory_space<vmem>>, vector<1x1xf32>
    %c0_163 = arith.constant 0 : index
    %c72_164 = arith.constant 72 : index
    %145 = vector.load %arg2[%c0_163, %c72_164] : memref<1x128xf32, #tpu.memory_space<vmem>>, vector<1x1xf32>
    tpu.vector_store %arg2[%c0_163, %c72_164], %144 {strides = array<i32>} : memref<1x128xf32, #tpu.memory_space<vmem>>, vector<1x1xf32>,
    %c0_165 = arith.constant 0 : index
    %c292 = arith.constant 292 : index
    %146 = vector.load %arg1[%c0_165, %c292] : memref<1x512xf32, #tpu.memory_space<vmem>>, vector<1x1xf32>
    %c0_166 = arith.constant 0 : index
    %c73 = arith.constant 73 : index
    %147 = vector.load %arg2[%c0_166, %c73] : memref<1x128xf32, #tpu.memory_space<vmem>>, vector<1x1xf32>
    tpu.vector_store %arg2[%c0_166, %c73], %146 {strides = array<i32>} : memref<1x128xf32, #tpu.memory_space<vmem>>, vector<1x1xf32>,
    %c0_167 = arith.constant 0 : index
    %c296 = arith.constant 296 : index
    %148 = vector.load %arg1[%c0_167, %c296] : memref<1x512xf32, #tpu.memory_space<vmem>>, vector<1x1xf32>
    %c0_168 = arith.constant 0 : index
    %c74 = arith.constant 74 : index
    %149 = vector.load %arg2[%c0_168, %c74] : memref<1x128xf32, #tpu.memory_space<vmem>>, vector<1x1xf32>
    tpu.vector_store %arg2[%c0_168, %c74], %148 {strides = array<i32>} : memref<1x128xf32, #tpu.memory_space<vmem>>, vector<1x1xf32>,
    %c0_169 = arith.constant 0 : index
    %c300 = arith.constant 300 : index
    %150 = vector.load %arg1[%c0_169, %c300] : memref<1x512xf32, #tpu.memory_space<vmem>>, vector<1x1xf32>
    %c0_170 = arith.constant 0 : index
    %c75 = arith.constant 75 : index
    %151 = vector.load %arg2[%c0_170, %c75] : memref<1x128xf32, #tpu.memory_space<vmem>>, vector<1x1xf32>
    tpu.vector_store %arg2[%c0_170, %c75], %150 {strides = array<i32>} : memref<1x128xf32, #tpu.memory_space<vmem>>, vector<1x1xf32>,
    %c0_171 = arith.constant 0 : index
    %c304 = arith.constant 304 : index
    %152 = vector.load %arg1[%c0_171, %c304] : memref<1x512xf32, #tpu.memory_space<vmem>>, vector<1x1xf32>
    %c0_172 = arith.constant 0 : index
    %c76_173 = arith.constant 76 : index
    %153 = vector.load %arg2[%c0_172, %c76_173] : memref<1x128xf32, #tpu.memory_space<vmem>>, vector<1x1xf32>
    tpu.vector_store %arg2[%c0_172, %c76_173], %152 {strides = array<i32>} : memref<1x128xf32, #tpu.memory_space<vmem>>, vector<1x1xf32>,
    %c0_174 = arith.constant 0 : index
    %c308 = arith.constant 308 : index
    %154 = vector.load %arg1[%c0_174, %c308] : memref<1x512xf32, #tpu.memory_space<vmem>>, vector<1x1xf32>
    %c0_175 = arith.constant 0 : index
    %c77 = arith.constant 77 : index
    %155 = vector.load %arg2[%c0_175, %c77] : memref<1x128xf32, #tpu.memory_space<vmem>>, vector<1x1xf32>
    tpu.vector_store %arg2[%c0_175, %c77], %154 {strides = array<i32>} : memref<1x128xf32, #tpu.memory_space<vmem>>, vector<1x1xf32>,
    %c0_176 = arith.constant 0 : index
    %c312 = arith.constant 312 : index
    %156 = vector.load %arg1[%c0_176, %c312] : memref<1x512xf32, #tpu.memory_space<vmem>>, vector<1x1xf32>
    %c0_177 = arith.constant 0 : index
    %c78 = arith.constant 78 : index
    %157 = vector.load %arg2[%c0_177, %c78] : memref<1x128xf32, #tpu.memory_space<vmem>>, vector<1x1xf32>
    tpu.vector_store %arg2[%c0_177, %c78], %156 {strides = array<i32>} : memref<1x128xf32, #tpu.memory_space<vmem>>, vector<1x1xf32>,
    %c0_178 = arith.constant 0 : index
    %c316 = arith.constant 316 : index
    %158 = vector.load %arg1[%c0_178, %c316] : memref<1x512xf32, #tpu.memory_space<vmem>>, vector<1x1xf32>
    %c0_179 = arith.constant 0 : index
    %c79 = arith.constant 79 : index
    %159 = vector.load %arg2[%c0_179, %c79] : memref<1x128xf32, #tpu.memory_space<vmem>>, vector<1x1xf32>
    tpu.vector_store %arg2[%c0_179, %c79], %158 {strides = array<i32>} : memref<1x128xf32, #tpu.memory_space<vmem>>, vector<1x1xf32>,
    %c0_180 = arith.constant 0 : index
    %c320 = arith.constant 320 : index
    %160 = vector.load %arg1[%c0_180, %c320] : memref<1x512xf32, #tpu.memory_space<vmem>>, vector<1x1xf32>
    %c0_181 = arith.constant 0 : index
    %c80_182 = arith.constant 80 : index
    %161 = vector.load %arg2[%c0_181, %c80_182] : memref<1x128xf32, #tpu.memory_space<vmem>>, vector<1x1xf32>
    tpu.vector_store %arg2[%c0_181, %c80_182], %160 {strides = array<i32>} : memref<1x128xf32, #tpu.memory_space<vmem>>, vector<1x1xf32>,
    %c0_183 = arith.constant 0 : index
    %c324 = arith.constant 324 : index
    %162 = vector.load %arg1[%c0_183, %c324] : memref<1x512xf32, #tpu.memory_space<vmem>>, vector<1x1xf32>
    %c0_184 = arith.constant 0 : index
    %c81 = arith.constant 81 : index
    %163 = vector.load %arg2[%c0_184, %c81] : memref<1x128xf32, #tpu.memory_space<vmem>>, vector<1x1xf32>
    tpu.vector_store %arg2[%c0_184, %c81], %162 {strides = array<i32>} : memref<1x128xf32, #tpu.memory_space<vmem>>, vector<1x1xf32>,
    %c0_185 = arith.constant 0 : index
    %c328 = arith.constant 328 : index
    %164 = vector.load %arg1[%c0_185, %c328] : memref<1x512xf32, #tpu.memory_space<vmem>>, vector<1x1xf32>
    %c0_186 = arith.constant 0 : index
    %c82 = arith.constant 82 : index
    %165 = vector.load %arg2[%c0_186, %c82] : memref<1x128xf32, #tpu.memory_space<vmem>>, vector<1x1xf32>
    tpu.vector_store %arg2[%c0_186, %c82], %164 {strides = array<i32>} : memref<1x128xf32, #tpu.memory_space<vmem>>, vector<1x1xf32>,
    %c0_187 = arith.constant 0 : index
    %c332 = arith.constant 332 : index
    %166 = vector.load %arg1[%c0_187, %c332] : memref<1x512xf32, #tpu.memory_space<vmem>>, vector<1x1xf32>
    %c0_188 = arith.constant 0 : index
    %c83 = arith.constant 83 : index
    %167 = vector.load %arg2[%c0_188, %c83] : memref<1x128xf32, #tpu.memory_space<vmem>>, vector<1x1xf32>
    tpu.vector_store %arg2[%c0_188, %c83], %166 {strides = array<i32>} : memref<1x128xf32, #tpu.memory_space<vmem>>, vector<1x1xf32>,
    %c0_189 = arith.constant 0 : index
    %c336 = arith.constant 336 : index
    %168 = vector.load %arg1[%c0_189, %c336] : memref<1x512xf32, #tpu.memory_space<vmem>>, vector<1x1xf32>
    %c0_190 = arith.constant 0 : index
    %c84_191 = arith.constant 84 : index
    %169 = vector.load %arg2[%c0_190, %c84_191] : memref<1x128xf32, #tpu.memory_space<vmem>>, vector<1x1xf32>
    tpu.vector_store %arg2[%c0_190, %c84_191], %168 {strides = array<i32>} : memref<1x128xf32, #tpu.memory_space<vmem>>, vector<1x1xf32>,
    %c0_192 = arith.constant 0 : index
    %c340 = arith.constant 340 : index
    %170 = vector.load %arg1[%c0_192, %c340] : memref<1x512xf32, #tpu.memory_space<vmem>>, vector<1x1xf32>
    %c0_193 = arith.constant 0 : index
    %c85 = arith.constant 85 : index
    %171 = vector.load %arg2[%c0_193, %c85] : memref<1x128xf32, #tpu.memory_space<vmem>>, vector<1x1xf32>
    tpu.vector_store %arg2[%c0_193, %c85], %170 {strides = array<i32>} : memref<1x128xf32, #tpu.memory_space<vmem>>, vector<1x1xf32>,
    %c0_194 = arith.constant 0 : index
    %c344 = arith.constant 344 : index
    %172 = vector.load %arg1[%c0_194, %c344] : memref<1x512xf32, #tpu.memory_space<vmem>>, vector<1x1xf32>
    %c0_195 = arith.constant 0 : index
    %c86 = arith.constant 86 : index
    %173 = vector.load %arg2[%c0_195, %c86] : memref<1x128xf32, #tpu.memory_space<vmem>>, vector<1x1xf32>
    tpu.vector_store %arg2[%c0_195, %c86], %172 {strides = array<i32>} : memref<1x128xf32, #tpu.memory_space<vmem>>, vector<1x1xf32>,
    %c0_196 = arith.constant 0 : index
    %c348 = arith.constant 348 : index
    %174 = vector.load %arg1[%c0_196, %c348] : memref<1x512xf32, #tpu.memory_space<vmem>>, vector<1x1xf32>
    %c0_197 = arith.constant 0 : index
    %c87 = arith.constant 87 : index
    %175 = vector.load %arg2[%c0_197, %c87] : memref<1x128xf32, #tpu.memory_space<vmem>>, vector<1x1xf32>
    tpu.vector_store %arg2[%c0_197, %c87], %174 {strides = array<i32>} : memref<1x128xf32, #tpu.memory_space<vmem>>, vector<1x1xf32>,
    %c0_198 = arith.constant 0 : index
    %c352 = arith.constant 352 : index
    %176 = vector.load %arg1[%c0_198, %c352] : memref<1x512xf32, #tpu.memory_space<vmem>>, vector<1x1xf32>
    %c0_199 = arith.constant 0 : index
    %c88_200 = arith.constant 88 : index
    %177 = vector.load %arg2[%c0_199, %c88_200] : memref<1x128xf32, #tpu.memory_space<vmem>>, vector<1x1xf32>
    tpu.vector_store %arg2[%c0_199, %c88_200], %176 {strides = array<i32>} : memref<1x128xf32, #tpu.memory_space<vmem>>, vector<1x1xf32>,
    %c0_201 = arith.constant 0 : index
    %c356 = arith.constant 356 : index
    %178 = vector.load %arg1[%c0_201, %c356] : memref<1x512xf32, #tpu.memory_space<vmem>>, vector<1x1xf32>
    %c0_202 = arith.constant 0 : index
    %c89 = arith.constant 89 : index
    %179 = vector.load %arg2[%c0_202, %c89] : memref<1x128xf32, #tpu.memory_space<vmem>>, vector<1x1xf32>
    tpu.vector_store %arg2[%c0_202, %c89], %178 {strides = array<i32>} : memref<1x128xf32, #tpu.memory_space<vmem>>, vector<1x1xf32>,
    %c0_203 = arith.constant 0 : index
    %c360 = arith.constant 360 : index
    %180 = vector.load %arg1[%c0_203, %c360] : memref<1x512xf32, #tpu.memory_space<vmem>>, vector<1x1xf32>
    %c0_204 = arith.constant 0 : index
    %c90 = arith.constant 90 : index
    %181 = vector.load %arg2[%c0_204, %c90] : memref<1x128xf32, #tpu.memory_space<vmem>>, vector<1x1xf32>
    tpu.vector_store %arg2[%c0_204, %c90], %180 {strides = array<i32>} : memref<1x128xf32, #tpu.memory_space<vmem>>, vector<1x1xf32>,
    %c0_205 = arith.constant 0 : index
    %c364 = arith.constant 364 : index
    %182 = vector.load %arg1[%c0_205, %c364] : memref<1x512xf32, #tpu.memory_space<vmem>>, vector<1x1xf32>
    %c0_206 = arith.constant 0 : index
    %c91 = arith.constant 91 : index
    %183 = vector.load %arg2[%c0_206, %c91] : memref<1x128xf32, #tpu.memory_space<vmem>>, vector<1x1xf32>
    tpu.vector_store %arg2[%c0_206, %c91], %182 {strides = array<i32>} : memref<1x128xf32, #tpu.memory_space<vmem>>, vector<1x1xf32>,
    %c0_207 = arith.constant 0 : index
    %c368 = arith.constant 368 : index
    %184 = vector.load %arg1[%c0_207, %c368] : memref<1x512xf32, #tpu.memory_space<vmem>>, vector<1x1xf32>
    %c0_208 = arith.constant 0 : index
    %c92_209 = arith.constant 92 : index
    %185 = vector.load %arg2[%c0_208, %c92_209] : memref<1x128xf32, #tpu.memory_space<vmem>>, vector<1x1xf32>
    tpu.vector_store %arg2[%c0_208, %c92_209], %184 {strides = array<i32>} : memref<1x128xf32, #tpu.memory_space<vmem>>, vector<1x1xf32>,
    %c0_210 = arith.constant 0 : index
    %c372 = arith.constant 372 : index
    %186 = vector.load %arg1[%c0_210, %c372] : memref<1x512xf32, #tpu.memory_space<vmem>>, vector<1x1xf32>
    %c0_211 = arith.constant 0 : index
    %c93 = arith.constant 93 : index
    %187 = vector.load %arg2[%c0_211, %c93] : memref<1x128xf32, #tpu.memory_space<vmem>>, vector<1x1xf32>
    tpu.vector_store %arg2[%c0_211, %c93], %186 {strides = array<i32>} : memref<1x128xf32, #tpu.memory_space<vmem>>, vector<1x1xf32>,
    %c0_212 = arith.constant 0 : index
    %c376 = arith.constant 376 : index
    %188 = vector.load %arg1[%c0_212, %c376] : memref<1x512xf32, #tpu.memory_space<vmem>>, vector<1x1xf32>
    %c0_213 = arith.constant 0 : index
    %c94 = arith.constant 94 : index
    %189 = vector.load %arg2[%c0_213, %c94] : memref<1x128xf32, #tpu.memory_space<vmem>>, vector<1x1xf32>
    tpu.vector_store %arg2[%c0_213, %c94], %188 {strides = array<i32>} : memref<1x128xf32, #tpu.memory_space<vmem>>, vector<1x1xf32>,
    %c0_214 = arith.constant 0 : index
    %c380 = arith.constant 380 : index
    %190 = vector.load %arg1[%c0_214, %c380] : memref<1x512xf32, #tpu.memory_space<vmem>>, vector<1x1xf32>
    %c0_215 = arith.constant 0 : index
    %c95 = arith.constant 95 : index
    %191 = vector.load %arg2[%c0_215, %c95] : memref<1x128xf32, #tpu.memory_space<vmem>>, vector<1x1xf32>
    tpu.vector_store %arg2[%c0_215, %c95], %190 {strides = array<i32>} : memref<1x128xf32, #tpu.memory_space<vmem>>, vector<1x1xf32>,
    %c0_216 = arith.constant 0 : index
    %c384 = arith.constant 384 : index
    %192 = vector.load %arg1[%c0_216, %c384] : memref<1x512xf32, #tpu.memory_space<vmem>>, vector<1x1xf32>
    %c0_217 = arith.constant 0 : index
    %c96_218 = arith.constant 96 : index
    %193 = vector.load %arg2[%c0_217, %c96_218] : memref<1x128xf32, #tpu.memory_space<vmem>>, vector<1x1xf32>
    tpu.vector_store %arg2[%c0_217, %c96_218], %192 {strides = array<i32>} : memref<1x128xf32, #tpu.memory_space<vmem>>, vector<1x1xf32>,
    %c0_219 = arith.constant 0 : index
    %c388 = arith.constant 388 : index
    %194 = vector.load %arg1[%c0_219, %c388] : memref<1x512xf32, #tpu.memory_space<vmem>>, vector<1x1xf32>
    %c0_220 = arith.constant 0 : index
    %c97 = arith.constant 97 : index
    %195 = vector.load %arg2[%c0_220, %c97] : memref<1x128xf32, #tpu.memory_space<vmem>>, vector<1x1xf32>
    tpu.vector_store %arg2[%c0_220, %c97], %194 {strides = array<i32>} : memref<1x128xf32, #tpu.memory_space<vmem>>, vector<1x1xf32>,
    %c0_221 = arith.constant 0 : index
    %c392 = arith.constant 392 : index
    %196 = vector.load %arg1[%c0_221, %c392] : memref<1x512xf32, #tpu.memory_space<vmem>>, vector<1x1xf32>
    %c0_222 = arith.constant 0 : index
    %c98 = arith.constant 98 : index
    %197 = vector.load %arg2[%c0_222, %c98] : memref<1x128xf32, #tpu.memory_space<vmem>>, vector<1x1xf32>
    tpu.vector_store %arg2[%c0_222, %c98], %196 {strides = array<i32>} : memref<1x128xf32, #tpu.memory_space<vmem>>, vector<1x1xf32>,
    %c0_223 = arith.constant 0 : index
    %c396 = arith.constant 396 : index
    %198 = vector.load %arg1[%c0_223, %c396] : memref<1x512xf32, #tpu.memory_space<vmem>>, vector<1x1xf32>
    %c0_224 = arith.constant 0 : index
    %c99 = arith.constant 99 : index
    %199 = vector.load %arg2[%c0_224, %c99] : memref<1x128xf32, #tpu.memory_space<vmem>>, vector<1x1xf32>
    tpu.vector_store %arg2[%c0_224, %c99], %198 {strides = array<i32>} : memref<1x128xf32, #tpu.memory_space<vmem>>, vector<1x1xf32>,
    %c0_225 = arith.constant 0 : index
    %c400 = arith.constant 400 : index
    %200 = vector.load %arg1[%c0_225, %c400] : memref<1x512xf32, #tpu.memory_space<vmem>>, vector<1x1xf32>
    %c0_226 = arith.constant 0 : index
    %c100_227 = arith.constant 100 : index
    %201 = vector.load %arg2[%c0_226, %c100_227] : memref<1x128xf32, #tpu.memory_space<vmem>>, vector<1x1xf32>
    tpu.vector_store %arg2[%c0_226, %c100_227], %200 {strides = array<i32>} : memref<1x128xf32, #tpu.memory_space<vmem>>, vector<1x1xf32>,
    %c0_228 = arith.constant 0 : index
    %c404 = arith.constant 404 : index
    %202 = vector.load %arg1[%c0_228, %c404] : memref<1x512xf32, #tpu.memory_space<vmem>>, vector<1x1xf32>
    %c0_229 = arith.constant 0 : index
    %c101 = arith.constant 101 : index
    %203 = vector.load %arg2[%c0_229, %c101] : memref<1x128xf32, #tpu.memory_space<vmem>>, vector<1x1xf32>
    tpu.vector_store %arg2[%c0_229, %c101], %202 {strides = array<i32>} : memref<1x128xf32, #tpu.memory_space<vmem>>, vector<1x1xf32>,
    %c0_230 = arith.constant 0 : index
    %c408 = arith.constant 408 : index
    %204 = vector.load %arg1[%c0_230, %c408] : memref<1x512xf32, #tpu.memory_space<vmem>>, vector<1x1xf32>
    %c0_231 = arith.constant 0 : index
    %c102 = arith.constant 102 : index
    %205 = vector.load %arg2[%c0_231, %c102] : memref<1x128xf32, #tpu.memory_space<vmem>>, vector<1x1xf32>
    tpu.vector_store %arg2[%c0_231, %c102], %204 {strides = array<i32>} : memref<1x128xf32, #tpu.memory_space<vmem>>, vector<1x1xf32>,
    %c0_232 = arith.constant 0 : index
    %c412 = arith.constant 412 : index
    %206 = vector.load %arg1[%c0_232, %c412] : memref<1x512xf32, #tpu.memory_space<vmem>>, vector<1x1xf32>
    %c0_233 = arith.constant 0 : index
    %c103 = arith.constant 103 : index
    %207 = vector.load %arg2[%c0_233, %c103] : memref<1x128xf32, #tpu.memory_space<vmem>>, vector<1x1xf32>
    tpu.vector_store %arg2[%c0_233, %c103], %206 {strides = array<i32>} : memref<1x128xf32, #tpu.memory_space<vmem>>, vector<1x1xf32>,
    %c0_234 = arith.constant 0 : index
    %c416 = arith.constant 416 : index
    %208 = vector.load %arg1[%c0_234, %c416] : memref<1x512xf32, #tpu.memory_space<vmem>>, vector<1x1xf32>
    %c0_235 = arith.constant 0 : index
    %c104_236 = arith.constant 104 : index
    %209 = vector.load %arg2[%c0_235, %c104_236] : memref<1x128xf32, #tpu.memory_space<vmem>>, vector<1x1xf32>
    tpu.vector_store %arg2[%c0_235, %c104_236], %208 {strides = array<i32>} : memref<1x128xf32, #tpu.memory_space<vmem>>, vector<1x1xf32>,
    %c0_237 = arith.constant 0 : index
    %c420 = arith.constant 420 : index
    %210 = vector.load %arg1[%c0_237, %c420] : memref<1x512xf32, #tpu.memory_space<vmem>>, vector<1x1xf32>
    %c0_238 = arith.constant 0 : index
    %c105 = arith.constant 105 : index
    %211 = vector.load %arg2[%c0_238, %c105] : memref<1x128xf32, #tpu.memory_space<vmem>>, vector<1x1xf32>
    tpu.vector_store %arg2[%c0_238, %c105], %210 {strides = array<i32>} : memref<1x128xf32, #tpu.memory_space<vmem>>, vector<1x1xf32>,
    %c0_239 = arith.constant 0 : index
    %c424 = arith.constant 424 : index
    %212 = vector.load %arg1[%c0_239, %c424] : memref<1x512xf32, #tpu.memory_space<vmem>>, vector<1x1xf32>
    %c0_240 = arith.constant 0 : index
    %c106 = arith.constant 106 : index
    %213 = vector.load %arg2[%c0_240, %c106] : memref<1x128xf32, #tpu.memory_space<vmem>>, vector<1x1xf32>
    tpu.vector_store %arg2[%c0_240, %c106], %212 {strides = array<i32>} : memref<1x128xf32, #tpu.memory_space<vmem>>, vector<1x1xf32>,
    %c0_241 = arith.constant 0 : index
    %c428 = arith.constant 428 : index
    %214 = vector.load %arg1[%c0_241, %c428] : memref<1x512xf32, #tpu.memory_space<vmem>>, vector<1x1xf32>
    %c0_242 = arith.constant 0 : index
    %c107 = arith.constant 107 : index
    %215 = vector.load %arg2[%c0_242, %c107] : memref<1x128xf32, #tpu.memory_space<vmem>>, vector<1x1xf32>
    tpu.vector_store %arg2[%c0_242, %c107], %214 {strides = array<i32>} : memref<1x128xf32, #tpu.memory_space<vmem>>, vector<1x1xf32>,
    %c0_243 = arith.constant 0 : index
    %c432 = arith.constant 432 : index
    %216 = vector.load %arg1[%c0_243, %c432] : memref<1x512xf32, #tpu.memory_space<vmem>>, vector<1x1xf32>
    %c0_244 = arith.constant 0 : index
    %c108_245 = arith.constant 108 : index
    %217 = vector.load %arg2[%c0_244, %c108_245] : memref<1x128xf32, #tpu.memory_space<vmem>>, vector<1x1xf32>
    tpu.vector_store %arg2[%c0_244, %c108_245], %216 {strides = array<i32>} : memref<1x128xf32, #tpu.memory_space<vmem>>, vector<1x1xf32>,
    %c0_246 = arith.constant 0 : index
    %c436 = arith.constant 436 : index
    %218 = vector.load %arg1[%c0_246, %c436] : memref<1x512xf32, #tpu.memory_space<vmem>>, vector<1x1xf32>
    %c0_247 = arith.constant 0 : index
    %c109 = arith.constant 109 : index
    %219 = vector.load %arg2[%c0_247, %c109] : memref<1x128xf32, #tpu.memory_space<vmem>>, vector<1x1xf32>
    tpu.vector_store %arg2[%c0_247, %c109], %218 {strides = array<i32>} : memref<1x128xf32, #tpu.memory_space<vmem>>, vector<1x1xf32>,
    %c0_248 = arith.constant 0 : index
    %c440 = arith.constant 440 : index
    %220 = vector.load %arg1[%c0_248, %c440] : memref<1x512xf32, #tpu.memory_space<vmem>>, vector<1x1xf32>
    %c0_249 = arith.constant 0 : index
    %c110 = arith.constant 110 : index
    %221 = vector.load %arg2[%c0_249, %c110] : memref<1x128xf32, #tpu.memory_space<vmem>>, vector<1x1xf32>
    tpu.vector_store %arg2[%c0_249, %c110], %220 {strides = array<i32>} : memref<1x128xf32, #tpu.memory_space<vmem>>, vector<1x1xf32>,
    %c0_250 = arith.constant 0 : index
    %c444 = arith.constant 444 : index
    %222 = vector.load %arg1[%c0_250, %c444] : memref<1x512xf32, #tpu.memory_space<vmem>>, vector<1x1xf32>
    %c0_251 = arith.constant 0 : index
    %c111 = arith.constant 111 : index
    %223 = vector.load %arg2[%c0_251, %c111] : memref<1x128xf32, #tpu.memory_space<vmem>>, vector<1x1xf32>
    tpu.vector_store %arg2[%c0_251, %c111], %222 {strides = array<i32>} : memref<1x128xf32, #tpu.memory_space<vmem>>, vector<1x1xf32>,
    %c0_252 = arith.constant 0 : index
    %c448 = arith.constant 448 : index
    %224 = vector.load %arg1[%c0_252, %c448] : memref<1x512xf32, #tpu.memory_space<vmem>>, vector<1x1xf32>
    %c0_253 = arith.constant 0 : index
    %c112_254 = arith.constant 112 : index
    %225 = vector.load %arg2[%c0_253, %c112_254] : memref<1x128xf32, #tpu.memory_space<vmem>>, vector<1x1xf32>
    tpu.vector_store %arg2[%c0_253, %c112_254], %224 {strides = array<i32>} : memref<1x128xf32, #tpu.memory_space<vmem>>, vector<1x1xf32>,
    %c0_255 = arith.constant 0 : index
    %c452 = arith.constant 452 : index
    %226 = vector.load %arg1[%c0_255, %c452] : memref<1x512xf32, #tpu.memory_space<vmem>>, vector<1x1xf32>
    %c0_256 = arith.constant 0 : index
    %c113 = arith.constant 113 : index
    %227 = vector.load %arg2[%c0_256, %c113] : memref<1x128xf32, #tpu.memory_space<vmem>>, vector<1x1xf32>
    tpu.vector_store %arg2[%c0_256, %c113], %226 {strides = array<i32>} : memref<1x128xf32, #tpu.memory_space<vmem>>, vector<1x1xf32>,
    %c0_257 = arith.constant 0 : index
    %c456 = arith.constant 456 : index
    %228 = vector.load %arg1[%c0_257, %c456] : memref<1x512xf32, #tpu.memory_space<vmem>>, vector<1x1xf32>
    %c0_258 = arith.constant 0 : index
    %c114 = arith.constant 114 : index
    %229 = vector.load %arg2[%c0_258, %c114] : memref<1x128xf32, #tpu.memory_space<vmem>>, vector<1x1xf32>
    tpu.vector_store %arg2[%c0_258, %c114], %228 {strides = array<i32>} : memref<1x128xf32, #tpu.memory_space<vmem>>, vector<1x1xf32>,
    %c0_259 = arith.constant 0 : index
    %c460 = arith.constant 460 : index
    %230 = vector.load %arg1[%c0_259, %c460] : memref<1x512xf32, #tpu.memory_space<vmem>>, vector<1x1xf32>
    %c0_260 = arith.constant 0 : index
    %c115 = arith.constant 115 : index
    %231 = vector.load %arg2[%c0_260, %c115] : memref<1x128xf32, #tpu.memory_space<vmem>>, vector<1x1xf32>
    tpu.vector_store %arg2[%c0_260, %c115], %230 {strides = array<i32>} : memref<1x128xf32, #tpu.memory_space<vmem>>, vector<1x1xf32>,
    %c0_261 = arith.constant 0 : index
    %c464 = arith.constant 464 : index
    %232 = vector.load %arg1[%c0_261, %c464] : memref<1x512xf32, #tpu.memory_space<vmem>>, vector<1x1xf32>
    %c0_262 = arith.constant 0 : index
    %c116_263 = arith.constant 116 : index
    %233 = vector.load %arg2[%c0_262, %c116_263] : memref<1x128xf32, #tpu.memory_space<vmem>>, vector<1x1xf32>
    tpu.vector_store %arg2[%c0_262, %c116_263], %232 {strides = array<i32>} : memref<1x128xf32, #tpu.memory_space<vmem>>, vector<1x1xf32>,
    %c0_264 = arith.constant 0 : index
    %c468 = arith.constant 468 : index
    %234 = vector.load %arg1[%c0_264, %c468] : memref<1x512xf32, #tpu.memory_space<vmem>>, vector<1x1xf32>
    %c0_265 = arith.constant 0 : index
    %c117 = arith.constant 117 : index
    %235 = vector.load %arg2[%c0_265, %c117] : memref<1x128xf32, #tpu.memory_space<vmem>>, vector<1x1xf32>
    tpu.vector_store %arg2[%c0_265, %c117], %234 {strides = array<i32>} : memref<1x128xf32, #tpu.memory_space<vmem>>, vector<1x1xf32>,
    %c0_266 = arith.constant 0 : index
    %c472 = arith.constant 472 : index
    %236 = vector.load %arg1[%c0_266, %c472] : memref<1x512xf32, #tpu.memory_space<vmem>>, vector<1x1xf32>
    %c0_267 = arith.constant 0 : index
    %c118 = arith.constant 118 : index
    %237 = vector.load %arg2[%c0_267, %c118] : memref<1x128xf32, #tpu.memory_space<vmem>>, vector<1x1xf32>
    tpu.vector_store %arg2[%c0_267, %c118], %236 {strides = array<i32>} : memref<1x128xf32, #tpu.memory_space<vmem>>, vector<1x1xf32>,
    %c0_268 = arith.constant 0 : index
    %c476 = arith.constant 476 : index
    %238 = vector.load %arg1[%c0_268, %c476] : memref<1x512xf32, #tpu.memory_space<vmem>>, vector<1x1xf32>
    %c0_269 = arith.constant 0 : index
    %c119 = arith.constant 119 : index
    %239 = vector.load %arg2[%c0_269, %c119] : memref<1x128xf32, #tpu.memory_space<vmem>>, vector<1x1xf32>
    tpu.vector_store %arg2[%c0_269, %c119], %238 {strides = array<i32>} : memref<1x128xf32, #tpu.memory_space<vmem>>, vector<1x1xf32>,
    %c0_270 = arith.constant 0 : index
    %c480 = arith.constant 480 : index
    %240 = vector.load %arg1[%c0_270, %c480] : memref<1x512xf32, #tpu.memory_space<vmem>>, vector<1x1xf32>
    %c0_271 = arith.constant 0 : index
    %c120_272 = arith.constant 120 : index
    %241 = vector.load %arg2[%c0_271, %c120_272] : memref<1x128xf32, #tpu.memory_space<vmem>>, vector<1x1xf32>
    tpu.vector_store %arg2[%c0_271, %c120_272], %240 {strides = array<i32>} : memref<1x128xf32, #tpu.memory_space<vmem>>, vector<1x1xf32>,
    %c0_273 = arith.constant 0 : index
    %c484 = arith.constant 484 : index
    %242 = vector.load %arg1[%c0_273, %c484] : memref<1x512xf32, #tpu.memory_space<vmem>>, vector<1x1xf32>
    %c0_274 = arith.constant 0 : index
    %c121 = arith.constant 121 : index
    %243 = vector.load %arg2[%c0_274, %c121] : memref<1x128xf32, #tpu.memory_space<vmem>>, vector<1x1xf32>
    tpu.vector_store %arg2[%c0_274, %c121], %242 {strides = array<i32>} : memref<1x128xf32, #tpu.memory_space<vmem>>, vector<1x1xf32>,
    %c0_275 = arith.constant 0 : index
    %c488 = arith.constant 488 : index
    %244 = vector.load %arg1[%c0_275, %c488] : memref<1x512xf32, #tpu.memory_space<vmem>>, vector<1x1xf32>
    %c0_276 = arith.constant 0 : index
    %c122 = arith.constant 122 : index
    %245 = vector.load %arg2[%c0_276, %c122] : memref<1x128xf32, #tpu.memory_space<vmem>>, vector<1x1xf32>
    tpu.vector_store %arg2[%c0_276, %c122], %244 {strides = array<i32>} : memref<1x128xf32, #tpu.memory_space<vmem>>, vector<1x1xf32>,
    %c0_277 = arith.constant 0 : index
    %c492 = arith.constant 492 : index
    %246 = vector.load %arg1[%c0_277, %c492] : memref<1x512xf32, #tpu.memory_space<vmem>>, vector<1x1xf32>
    %c0_278 = arith.constant 0 : index
    %c123 = arith.constant 123 : index
    %247 = vector.load %arg2[%c0_278, %c123] : memref<1x128xf32, #tpu.memory_space<vmem>>, vector<1x1xf32>
    tpu.vector_store %arg2[%c0_278, %c123], %246 {strides = array<i32>} : memref<1x128xf32, #tpu.memory_space<vmem>>, vector<1x1xf32>,
    %c0_279 = arith.constant 0 : index
    %c496 = arith.constant 496 : index
    %248 = vector.load %arg1[%c0_279, %c496] : memref<1x512xf32, #tpu.memory_space<vmem>>, vector<1x1xf32>
    %c0_280 = arith.constant 0 : index
    %c124_281 = arith.constant 124 : index
    %249 = vector.load %arg2[%c0_280, %c124_281] : memref<1x128xf32, #tpu.memory_space<vmem>>, vector<1x1xf32>
    tpu.vector_store %arg2[%c0_280, %c124_281], %248 {strides = array<i32>} : memref<1x128xf32, #tpu.memory_space<vmem>>, vector<1x1xf32>,
    %c0_282 = arith.constant 0 : index
    %c500 = arith.constant 500 : index
    %250 = vector.load %arg1[%c0_282, %c500] : memref<1x512xf32, #tpu.memory_space<vmem>>, vector<1x1xf32>
    %c0_283 = arith.constant 0 : index
    %c125 = arith.constant 125 : index
    %251 = vector.load %arg2[%c0_283, %c125] : memref<1x128xf32, #tpu.memory_space<vmem>>, vector<1x1xf32>
    tpu.vector_store %arg2[%c0_283, %c125], %250 {strides = array<i32>} : memref<1x128xf32, #tpu.memory_space<vmem>>, vector<1x1xf32>,
    %c0_284 = arith.constant 0 : index
    %c504 = arith.constant 504 : index
    %252 = vector.load %arg1[%c0_284, %c504] : memref<1x512xf32, #tpu.memory_space<vmem>>, vector<1x1xf32>
    %c0_285 = arith.constant 0 : index
    %c126 = arith.constant 126 : index
    %253 = vector.load %arg2[%c0_285, %c126] : memref<1x128xf32, #tpu.memory_space<vmem>>, vector<1x1xf32>
    tpu.vector_store %arg2[%c0_285, %c126], %252 {strides = array<i32>} : memref<1x128xf32, #tpu.memory_space<vmem>>, vector<1x1xf32>,
    %c0_286 = arith.constant 0 : index
    %c508 = arith.constant 508 : index
    %254 = vector.load %arg1[%c0_286, %c508] : memref<1x512xf32, #tpu.memory_space<vmem>>, vector<1x1xf32>
    %c0_287 = arith.constant 0 : index
    %c127 = arith.constant 127 : index
    %255 = vector.load %arg2[%c0_287, %c127] : memref<1x128xf32, #tpu.memory_space<vmem>>, vector<1x1xf32>
    tpu.vector_store %arg2[%c0_287, %c127], %254 {strides = array<i32>} : memref<1x128xf32, #tpu.memory_space<vmem>>, vector<1x1xf32>,
    return
  }
  func.func @transform_0(%arg0: i32) -> (i32, i32) {
    %c0_i32 = arith.constant 0 : i32
    %c0_i32_0 = arith.constant 0 : i32
    return %arg0, %c0_i32 : i32, i32
  }
  func.func @transform_1(%arg0: i32) -> (i32, i32) {
    %c0_i32 = arith.constant 0 : i32
    %c0_i32_0 = arith.constant 0 : i32
    return %arg0, %c0_i32 : i32, i32
  }
}

</mosaic_0001>

<llo_original>
// kernel: tpu_custom_call.1
$region0: #{tpu_custom_call.1}
  #allocation0 [shape = 'u32[]', space=smem, size = 0x4, offset = 0x4, fixed_abs, tag = 'smem constant byte address 0x4 - core index']
  #allocation1 [shape = 'u32[72,128]{1,0:T(1,128)}', space=vmem, size = 0x9000, scoped, tag = 'internal scratch']
  %s0 = inlined_call_operand.hbm [shape: f32[1,512], index: 0, kind: input, shape index: {}]
  %s1 = inlined_call_operand.hbm [shape: f32[1,128], index: 1, kind: output, shape index: {}]
  %s2 = sld [smem:[#allocation0]]
  $region18: #{tpu_custom_call.1} parent=0
    _
  %s4 = ssub.s32 1, %s2
  %s5 = scalar_select 0, %s4, %s2
  $region1: #{tpu_custom_call.1} parent=0
    #allocation2 [shape = 'u8[2048]{0}', space=vmem, size = 0x800, scoped, tag = 'input window, operand 0, single buffered']
    #allocation3 [shape = 's32[1]{0}', space=sflag, size = 0x4, scoped, tag = 'scoped memory for tpu_custom_call.1']
    #allocation4 [shape = 's32[1]{0}', space=sflag, size = 0x4, scoped, tag = 'scoped memory for tpu_custom_call.1']
    #allocation5 [shape = 'u8[512]{0}', space=vmem, size = 0x400, scoped, tag = 'output window, operand 0, single buffered']
    %6 = vsyncpa [#allocation3], 0
    %7 = vsyncpa [#allocation4], 0
    // Predicated region
    $region2: #{tpu_custom_call.1} parent=1 // pred_check
      _
    $region3: #{tpu_custom_call.1} parent=1 // pred_check_branch
      %9 = sbr.rel (0) target = $region5
    $region4: #{tpu_custom_call.1} parent=1 // pred_region
      %11 = vsyncadd [#allocation3], 0
      %s13 = sshll.u32 %s0, 4
      %s14 = int_to_ptr.hbm [resolvable:$true] %s13
      %s15 = sshll.u32 [#allocation2], 4
      %s16 = int_to_ptr.vmem [resolvable:$true] %s15
      %18 = dma.hbm_to_vmem [thread:$0]  %s14, 64, %s16, [#allocation3]
    $region5: #{tpu_custom_call.1} parent=1 // pred_fallthru
      _
    // Predicated region
    $region6: #{tpu_custom_call.1} parent=1 // pred_check
      _
    $region7: #{tpu_custom_call.1} parent=1 // pred_check_branch
      %20 = sbr.rel (0) target = $region9
    $region8: #{tpu_custom_call.1} parent=1 // pred_region
      %22 = dma.done [#allocation3], 64
    $region9: #{tpu_custom_call.1} parent=1 // pred_fallthru
      _
    %v23 = vld [vmem:[#allocation2] sm:$0x1]
    %vm24 = vcmask 0
    %25 = vst.msk [vmem:[#allocation5] sm:$0x1] %vm24, %v23
    %v26 = vld [vmem:[#allocation2] sm:$0x1]
    %v28 = vperm.slane %v26, 0
    %29 = vrot.lane.b32.xlu0 %v28, 125
    %v30 = vpop.permute.xlu0 %29
    %vm32 = vcmask 8200
    %33 = vst.msk [vmem:[#allocation5] sm:$0x1] %vm32, %v30
    %v34 = vld [vmem:[#allocation2] sm:$0x1]
    %v36 = vperm.slane %v34, 0
    %37 = vrot.lane.b32.xlu0 %v36, 122
    %v38 = vpop.permute.xlu0 %37
    %vm40 = vcmask 16400
    %41 = vst.msk [vmem:[#allocation5] sm:$0x1] %vm40, %v38
    %v42 = vld [vmem:[#allocation2] sm:$0x1]
    %v44 = vperm.slane %v42, 0
    %45 = vrot.lane.b32.xlu0 %v44, 119
    %v46 = vpop.permute.xlu0 %45
    %vm48 = vcmask 24600
    %49 = vst.msk [vmem:[#allocation5] sm:$0x1] %vm48, %v46
    %v50 = vld [vmem:[#allocation2] sm:$0x1]
    %v52 = vperm.slane %v50, 0
    %53 = vrot.lane.b32.xlu0 %v52, 116
    %v54 = vpop.permute.xlu0 %53
    %vm56 = vcmask 32800
    %57 = vst.msk [vmem:[#allocation5] sm:$0x1] %vm56, %v54
    %v58 = vld [vmem:[#allocation2] sm:$0x1]
    %v60 = vperm.slane %v58, 0
    %61 = vrot.lane.b32.xlu0 %v60, 113
    %v62 = vpop.permute.xlu0 %61
    %vm64 = vcmask 41000
    %65 = vst.msk [vmem:[#allocation5] sm:$0x1] %vm64, %v62
    %v66 = vld [vmem:[#allocation2] sm:$0x1]
    %v68 = vperm.slane %v66, 0
    %69 = vrot.lane.b32.xlu0 %v68, 110
    %v70 = vpop.permute.xlu0 %69
    %vm72 = vcmask 49200
    %73 = vst.msk [vmem:[#allocation5] sm:$0x1] %vm72, %v70
    %v74 = vld [vmem:[#allocation2] sm:$0x1]
    %v76 = vperm.slane %v74, 0
    %77 = vrot.lane.b32.xlu0 %v76, 107
    %v78 = vpop.permute.xlu0 %77
    %vm80 = vcmask 57400
    %81 = vst.msk [vmem:[#allocation5] sm:$0x1] %vm80, %v78
    %v82 = vld [vmem:[#allocation2] sm:$0x1]
    %v84 = vperm.slane %v82, 0
    %85 = vrot.lane.b32.xlu0 %v84, 104
    %v86 = vpop.permute.xlu0 %85
    %vm88 = vcmask 65600
    %89 = vst.msk [vmem:[#allocation5] sm:$0x1] %vm88, %v86
    %v90 = vld [vmem:[#allocation2] sm:$0x1]
    %v92 = vperm.slane %v90, 0
    %93 = vrot.lane.b32.xlu0 %v92, 101
    %v94 = vpop.permute.xlu0 %93
    %vm96 = vcmask 73800
    %97 = vst.msk [vmem:[#allocation5] sm:$0x1] %vm96, %v94
    %v98 = vld [vmem:[#allocation2] sm:$0x1]
    %v100 = vperm.slane %v98, 0
    %101 = vrot.lane.b32.xlu0 %v100, 98
    %v102 = vpop.permute.xlu0 %101
    %vm104 = vcmask 82000
    %105 = vst.msk [vmem:[#allocation5] sm:$0x1] %vm104, %v102
    %v106 = vld [vmem:[#allocation2] sm:$0x1]
    %v108 = vperm.slane %v106, 0
    %109 = vrot.lane.b32.xlu0 %v108, 95
    %v110 = vpop.permute.xlu0 %109
    %vm112 = vcmask 90200
    %113 = vst.msk [vmem:[#allocation5] sm:$0x1] %vm112, %v110
    %v114 = vld [vmem:[#allocation2] sm:$0x1]
    %v116 = vperm.slane %v114, 0
    %117 = vrot.lane.b32.xlu0 %v116, 92
    %v118 = vpop.permute.xlu0 %117
    %vm120 = vcmask 98400
    %121 = vst.msk [vmem:[#allocation5] sm:$0x1] %vm120, %v118
    %v122 = vld [vmem:[#allocation2] sm:$0x1]
    %v124 = vperm.slane %v122, 0
    %125 = vrot.lane.b32.xlu0 %v124, 89
    %v126 = vpop.permute.xlu0 %125
    %vm128 = vcmask 106600
    %129 = vst.msk [vmem:[#allocation5] sm:$0x1] %vm128, %v126
    %v130 = vld [vmem:[#allocation2] sm:$0x1]
    %v132 = vperm.slane %v130, 0
    %133 = vrot.lane.b32.xlu0 %v132, 86
    %v134 = vpop.permute.xlu0 %133
    %vm136 = vcmask 114800
    %137 = vst.msk [vmem:[#allocation5] sm:$0x1] %vm136, %v134
    %v138 = vld [vmem:[#allocation2] sm:$0x1]
    %v140 = vperm.slane %v138, 0
    %141 = vrot.lane.b32.xlu0 %v140, 83
    %v142 = vpop.permute.xlu0 %141
    %vm144 = vcmask 123000
    %145 = vst.msk [vmem:[#allocation5] sm:$0x1] %vm144, %v142
    %v146 = vld [vmem:[#allocation2] sm:$0x1]
    %v148 = vperm.slane %v146, 0
    %149 = vrot.lane.b32.xlu0 %v148, 80
    %v150 = vpop.permute.xlu0 %149
    %vm152 = vcmask 131200
    %153 = vst.msk [vmem:[#allocation5] sm:$0x1] %vm152, %v150
    %v154 = vld [vmem:[#allocation2] sm:$0x1]
    %v156 = vperm.slane %v154, 0
    %157 = vrot.lane.b32.xlu0 %v156, 77
    %v158 = vpop.permute.xlu0 %157
    %vm160 = vcmask 139400
    %161 = vst.msk [vmem:[#allocation5] sm:$0x1] %vm160, %v158
    %v162 = vld [vmem:[#allocation2] sm:$0x1]
    %v164 = vperm.slane %v162, 0
    %165 = vrot.lane.b32.xlu0 %v164, 74
    %v166 = vpop.permute.xlu0 %165
    %vm168 = vcmask 147600
    %169 = vst.msk [vmem:[#allocation5] sm:$0x1] %vm168, %v166
    %v170 = vld [vmem:[#allocation2] sm:$0x1]
    %v172 = vperm.slane %v170, 0
    %173 = vrot.lane.b32.xlu0 %v172, 71
    %v174 = vpop.permute.xlu0 %173
    %vm176 = vcmask 155800
    %177 = vst.msk [vmem:[#allocation5] sm:$0x1] %vm176, %v174
    %v178 = vld [vmem:[#allocation2] sm:$0x1]
    %v180 = vperm.slane %v178, 0
    %181 = vrot.lane.b32.xlu0 %v180, 68
    %v182 = vpop.permute.xlu0 %181
    %vm184 = vcmask 164000
    %185 = vst.msk [vmem:[#allocation5] sm:$0x1] %vm184, %v182
    %v186 = vld [vmem:[#allocation2] sm:$0x1]
    %v188 = vperm.slane %v186, 0
    %189 = vrot.lane.b32.xlu0 %v188, 65
    %v190 = vpop.permute.xlu0 %189
    %vm192 = vcmask 172200
    %193 = vst.msk [vmem:[#allocation5] sm:$0x1] %vm192, %v190
    %v194 = vld [vmem:[#allocation2] sm:$0x1]
    %v196 = vperm.slane %v194, 0
    %197 = vrot.lane.b32.xlu0 %v196, 62
    %v198 = vpop.permute.xlu0 %197
    %vm200 = vcmask 180400
    %201 = vst.msk [vmem:[#allocation5] sm:$0x1] %vm200, %v198
    %v202 = vld [vmem:[#allocation2] sm:$0x1]
    %v204 = vperm.slane %v202, 0
    %205 = vrot.lane.b32.xlu0 %v204, 59
    %v206 = vpop.permute.xlu0 %205
    %vm208 = vcmask 188600
    %209 = vst.msk [vmem:[#allocation5] sm:$0x1] %vm208, %v206
    %v210 = vld [vmem:[#allocation2] sm:$0x1]
    %v212 = vperm.slane %v210, 0
    %213 = vrot.lane.b32.xlu0 %v212, 56
    %v214 = vpop.permute.xlu0 %213
    %vm216 = vcmask 196800
    %217 = vst.msk [vmem:[#allocation5] sm:$0x1] %vm216, %v214
    %v218 = vld [vmem:[#allocation2] sm:$0x1]
    %v220 = vperm.slane %v218, 0
    %221 = vrot.lane.b32.xlu0 %v220, 53
    %v222 = vpop.permute.xlu0 %221
    %vm224 = vcmask 205000
    %225 = vst.msk [vmem:[#allocation5] sm:$0x1] %vm224, %v222
    %v226 = vld [vmem:[#allocation2] sm:$0x1]
    %v228 = vperm.slane %v226, 0
    %229 = vrot.lane.b32.xlu0 %v228, 50
    %v230 = vpop.permute.xlu0 %229
    %vm232 = vcmask 213200
    %233 = vst.msk [vmem:[#allocation5] sm:$0x1] %vm232, %v230
    %v234 = vld [vmem:[#allocation2] sm:$0x1]
    %v236 = vperm.slane %v234, 0
    %237 = vrot.lane.b32.xlu0 %v236, 47
    %v238 = vpop.permute.xlu0 %237
    %vm240 = vcmask 221400
    %241 = vst.msk [vmem:[#allocation5] sm:$0x1] %vm240, %v238
    %v242 = vld [vmem:[#allocation2] sm:$0x1]
    %v244 = vperm.slane %v242, 0
    %245 = vrot.lane.b32.xlu0 %v244, 44
    %v246 = vpop.permute.xlu0 %245
    %vm248 = vcmask 229600
    %249 = vst.msk [vmem:[#allocation5] sm:$0x1] %vm248, %v246
    %v250 = vld [vmem:[#allocation2] sm:$0x1]
    %v252 = vperm.slane %v250, 0
    %253 = vrot.lane.b32.xlu0 %v252, 41
    %v254 = vpop.permute.xlu0 %253
    %vm256 = vcmask 237800
    %257 = vst.msk [vmem:[#allocation5] sm:$0x1] %vm256, %v254
    %v258 = vld [vmem:[#allocation2] sm:$0x1]
    %v260 = vperm.slane %v258, 0
    %261 = vrot.lane.b32.xlu0 %v260, 38
    %v262 = vpop.permute.xlu0 %261
    %vm264 = vcmask 246000
    %265 = vst.msk [vmem:[#allocation5] sm:$0x1] %vm264, %v262
    %v266 = vld [vmem:[#allocation2] sm:$0x1]
    %v268 = vperm.slane %v266, 0
    %269 = vrot.lane.b32.xlu0 %v268, 35
    %v270 = vpop.permute.xlu0 %269
    %vm272 = vcmask 254200
    %273 = vst.msk [vmem:[#allocation5] sm:$0x1] %vm272, %v270
    %v274 = vld [vmem:[#allocation2 + $0x1] sm:$0x1]
    %v276 = vperm.slane %v274, 0
    %277 = vrot.lane.b32.xlu0 %v276, 32
    %v278 = vpop.permute.xlu0 %277
    %vm280 = vcmask 262400
    %281 = vst.msk [vmem:[#allocation5] sm:$0x1] %vm280, %v278
    %v282 = vld [vmem:[#allocation2 + $0x1] sm:$0x1]
    %v284 = vperm.slane %v282, 0
    %285 = vrot.lane.b32.xlu0 %v284, 29
    %v286 = vpop.permute.xlu0 %285
    %vm288 = vcmask 270600
    %289 = vst.msk [vmem:[#allocation5] sm:$0x1] %vm288, %v286
    %v290 = vld [vmem:[#allocation2 + $0x1] sm:$0x1]
    %v292 = vperm.slane %v290, 0
    %293 = vrot.lane.b32.xlu0 %v292, 26
    %v294 = vpop.permute.xlu0 %293
    %vm296 = vcmask 278800
    %297 = vst.msk [vmem:[#allocation5] sm:$0x1] %vm296, %v294
    %v298 = vld [vmem:[#allocation2 + $0x1] sm:$0x1]
    %v300 = vperm.slane %v298, 0
    %301 = vrot.lane.b32.xlu0 %v300, 23
    %v302 = vpop.permute.xlu0 %301
    %vm304 = vcmask 287000
    %305 = vst.msk [vmem:[#allocation5] sm:$0x1] %vm304, %v302
    %v306 = vld [vmem:[#allocation2 + $0x1] sm:$0x1]
    %v308 = vperm.slane %v306, 0
    %309 = vrot.lane.b32.xlu0 %v308, 20
    %v310 = vpop.permute.xlu0 %309
    %vm312 = vcmask 295200
    %313 = vst.msk [vmem:[#allocation5] sm:$0x1] %vm312, %v310
    %v314 = vld [vmem:[#allocation2 + $0x1] sm:$0x1]
    %v316 = vperm.slane %v314, 0
    %317 = vrot.lane.b32.xlu0 %v316, 17
    %v318 = vpop.permute.xlu0 %317
    %vm320 = vcmask 303400
    %321 = vst.msk [vmem:[#allocation5] sm:$0x1] %vm320, %v318
    %v322 = vld [vmem:[#allocation2 + $0x1] sm:$0x1]
    %v324 = vperm.slane %v322, 0
    %325 = vrot.lane.b32.xlu0 %v324, 14
    %v326 = vpop.permute.xlu0 %325
    %vm328 = vcmask 311600
    %329 = vst.msk [vmem:[#allocation5] sm:$0x1] %vm328, %v326
    %v330 = vld [vmem:[#allocation2 + $0x1] sm:$0x1]
    %v332 = vperm.slane %v330, 0
    %333 = vrot.lane.b32.xlu0 %v332, 11
    %v334 = vpop.permute.xlu0 %333
    %vm336 = vcmask 319800
    %337 = vst.msk [vmem:[#allocation5] sm:$0x1] %vm336, %v334
    %v338 = vld [vmem:[#allocation2 + $0x1] sm:$0x1]
    %v340 = vperm.slane %v338, 0
    %341 = vrot.lane.b32.xlu0 %v340, 8
    %v342 = vpop.permute.xlu0 %341
    %vm344 = vcmask 328000
    %345 = vst.msk [vmem:[#allocation5] sm:$0x1] %vm344, %v342
    %v346 = vld [vmem:[#allocation2 + $0x1] sm:$0x1]
    %v348 = vperm.slane %v346, 0
    %349 = vrot.lane.b32.xlu0 %v348, 5
    %v350 = vpop.permute.xlu0 %349
    %vm352 = vcmask 336200
    %353 = vst.msk [vmem:[#allocation5] sm:$0x1] %vm352, %v350
    %v354 = vld [vmem:[#allocation2 + $0x1] sm:$0x1]
    %v356 = vperm.slane %v354, 0
    %357 = vrot.lane.b32.xlu0 %v356, 2
    %v358 = vpop.permute.xlu0 %357
    %vm360 = vcmask 344400
    %361 = vst.msk [vmem:[#allocation5] sm:$0x1] %vm360, %v358
    %v362 = vld [vmem:[#allocation2 + $0x1] sm:$0x1]
    %v364 = vperm.slane %v362, 0
    %365 = vrot.lane.b32.xlu0 %v364, 127
    %v366 = vpop.permute.xlu0 %365
    %vm368 = vcmask 352600
    %369 = vst.msk [vmem:[#allocation5] sm:$0x1] %vm368, %v366
    %v370 = vld [vmem:[#allocation2 + $0x1] sm:$0x1]
    %v372 = vperm.slane %v370, 0
    %373 = vrot.lane.b32.xlu0 %v372, 124
    %v374 = vpop.permute.xlu0 %373
    %vm376 = vcmask 360800
    %377 = vst.msk [vmem:[#allocation5] sm:$0x1] %vm376, %v374
    %v378 = vld [vmem:[#allocation2 + $0x1] sm:$0x1]
    %v380 = vperm.slane %v378, 0
    %381 = vrot.lane.b32.xlu0 %v380, 121
    %v382 = vpop.permute.xlu0 %381
    %vm384 = vcmask 369000
    %385 = vst.msk [vmem:[#allocation5] sm:$0x1] %vm384, %v382
    %v386 = vld [vmem:[#allocation2 + $0x1] sm:$0x1]
    %v388 = vperm.slane %v386, 0
    %389 = vrot.lane.b32.xlu0 %v388, 118
    %v390 = vpop.permute.xlu0 %389
    %vm392 = vcmask 377200
    %393 = vst.msk [vmem:[#allocation5] sm:$0x1] %vm392, %v390
    %v394 = vld [vmem:[#allocation2 + $0x1] sm:$0x1]
    %v396 = vperm.slane %v394, 0
    %397 = vrot.lane.b32.xlu0 %v396, 115
    %v398 = vpop.permute.xlu0 %397
    %vm400 = vcmask 385400
    %401 = vst.msk [vmem:[#allocation5] sm:$0x1] %vm400, %v398
    %v402 = vld [vmem:[#allocation2 + $0x1] sm:$0x1]
    %v404 = vperm.slane %v402, 0
    %405 = vrot.lane.b32.xlu0 %v404, 112
    %v406 = vpop.permute.xlu0 %405
    %vm408 = vcmask 393600
    %409 = vst.msk [vmem:[#allocation5] sm:$0x1] %vm408, %v406
    %v410 = vld [vmem:[#allocation2 + $0x1] sm:$0x1]
    %v412 = vperm.slane %v410, 0
    %413 = vrot.lane.b32.xlu0 %v412, 109
    %v414 = vpop.permute.xlu0 %413
    %vm416 = vcmask 401800
    %417 = vst.msk [vmem:[#allocation5] sm:$0x1] %vm416, %v414
    %v418 = vld [vmem:[#allocation2 + $0x1] sm:$0x1]
    %v420 = vperm.slane %v418, 0
    %421 = vrot.lane.b32.xlu0 %v420, 106
    %v422 = vpop.permute.xlu0 %421
    %vm424 = vcmask 410000
    %425 = vst.msk [vmem:[#allocation5] sm:$0x1] %vm424, %v422
    %v426 = vld [vmem:[#allocation2 + $0x1] sm:$0x1]
    %v428 = vperm.slane %v426, 0
    %429 = vrot.lane.b32.xlu0 %v428, 103
    %v430 = vpop.permute.xlu0 %429
    %vm432 = vcmask 418200
    %433 = vst.msk [vmem:[#allocation5] sm:$0x1] %vm432, %v430
    %v434 = vld [vmem:[#allocation2 + $0x1] sm:$0x1]
    %v436 = vperm.slane %v434, 0
    %437 = vrot.lane.b32.xlu0 %v436, 100
    %v438 = vpop.permute.xlu0 %437
    %vm440 = vcmask 426400
    %441 = vst.msk [vmem:[#allocation5] sm:$0x1] %vm440, %v438
    %v442 = vld [vmem:[#allocation2 + $0x1] sm:$0x1]
    %v444 = vperm.slane %v442, 0
    %445 = vrot.lane.b32.xlu0 %v444, 97
    %v446 = vpop.permute.xlu0 %445
    %vm448 = vcmask 434600
    %449 = vst.msk [vmem:[#allocation5] sm:$0x1] %vm448, %v446
    %v450 = vld [vmem:[#allocation2 + $0x1] sm:$0x1]
    %v452 = vperm.slane %v450, 0
    %453 = vrot.lane.b32.xlu0 %v452, 94
    %v454 = vpop.permute.xlu0 %453
    %vm456 = vcmask 442800
    %457 = vst.msk [vmem:[#allocation5] sm:$0x1] %vm456, %v454
    %v458 = vld [vmem:[#allocation2 + $0x1] sm:$0x1]
    %v460 = vperm.slane %v458, 0
    %461 = vrot.lane.b32.xlu0 %v460, 91
    %v462 = vpop.permute.xlu0 %461
    %vm464 = vcmask 451000
    %465 = vst.msk [vmem:[#allocation5] sm:$0x1] %vm464, %v462
    %v466 = vld [vmem:[#allocation2 + $0x1] sm:$0x1]
    %v468 = vperm.slane %v466, 0
    %469 = vrot.lane.b32.xlu0 %v468, 88
    %v470 = vpop.permute.xlu0 %469
    %vm472 = vcmask 459200
    %473 = vst.msk [vmem:[#allocation5] sm:$0x1] %vm472, %v470
    %v474 = vld [vmem:[#allocation2 + $0x1] sm:$0x1]
    %v476 = vperm.slane %v474, 0
    %477 = vrot.lane.b32.xlu0 %v476, 85
    %v478 = vpop.permute.xlu0 %477
    %vm480 = vcmask 467400
    %481 = vst.msk [vmem:[#allocation5] sm:$0x1] %vm480, %v478
    %v482 = vld [vmem:[#allocation2 + $0x1] sm:$0x1]
    %v484 = vperm.slane %v482, 0
    %485 = vrot.lane.b32.xlu0 %v484, 82
    %v486 = vpop.permute.xlu0 %485
    %vm488 = vcmask 475600
    %489 = vst.msk [vmem:[#allocation5] sm:$0x1] %vm488, %v486
    %v490 = vld [vmem:[#allocation2 + $0x1] sm:$0x1]
    %v492 = vperm.slane %v490, 0
    %493 = vrot.lane.b32.xlu0 %v492, 79
    %v494 = vpop.permute.xlu0 %493
    %vm496 = vcmask 483800
    %497 = vst.msk [vmem:[#allocation5] sm:$0x1] %vm496, %v494
    %v498 = vld [vmem:[#allocation2 + $0x1] sm:$0x1]
    %v500 = vperm.slane %v498, 0
    %501 = vrot.lane.b32.xlu0 %v500, 76
    %v502 = vpop.permute.xlu0 %501
    %vm504 = vcmask 492000
    %505 = vst.msk [vmem:[#allocation5] sm:$0x1] %vm504, %v502
    %v506 = vld [vmem:[#allocation2 + $0x1] sm:$0x1]
    %v508 = vperm.slane %v506, 0
    %509 = vrot.lane.b32.xlu0 %v508, 73
    %v510 = vpop.permute.xlu0 %509
    %vm512 = vcmask 500200
    %513 = vst.msk [vmem:[#allocation5] sm:$0x1] %vm512, %v510
    %v514 = vld [vmem:[#allocation2 + $0x1] sm:$0x1]
    %v516 = vperm.slane %v514, 0
    %517 = vrot.lane.b32.xlu0 %v516, 70
    %v518 = vpop.permute.xlu0 %517
    %vm520 = vcmask 508400
    %521 = vst.msk [vmem:[#allocation5] sm:$0x1] %vm520, %v518
    %v522 = vld [vmem:[#allocation2 + $0x1] sm:$0x1]
    %v524 = vperm.slane %v522, 0
    %525 = vrot.lane.b32.xlu0 %v524, 67
    %v526 = vpop.permute.xlu0 %525
    %vm528 = vcmask 516600
    %529 = vst.msk [vmem:[#allocation5] sm:$0x1] %vm528, %v526
    %v530 = vld [vmem:[#allocation2 + $0x2] sm:$0x1]
    %v532 = vperm.slane %v530, 0
    %533 = vrot.lane.b32.xlu0 %v532, 64
    %v534 = vpop.permute.xlu0 %533
    %vm536 = vcmask 524800
    %537 = vst.msk [vmem:[#allocation5] sm:$0x1] %vm536, %v534
    %v538 = vld [vmem:[#allocation2 + $0x2] sm:$0x1]
    %v540 = vperm.slane %v538, 0
    %541 = vrot.lane.b32.xlu0 %v540, 61
    %v542 = vpop.permute.xlu0 %541
    %vm544 = vcmask 533000
    %545 = vst.msk [vmem:[#allocation5] sm:$0x1] %vm544, %v542
    %v546 = vld [vmem:[#allocation2 + $0x2] sm:$0x1]
    %v548 = vperm.slane %v546, 0
    %549 = vrot.lane.b32.xlu0 %v548, 58
    %v550 = vpop.permute.xlu0 %549
    %vm552 = vcmask 541200
    %553 = vst.msk [vmem:[#allocation5] sm:$0x1] %vm552, %v550
    %v554 = vld [vmem:[#allocation2 + $0x2] sm:$0x1]
    %v556 = vperm.slane %v554, 0
    %557 = vrot.lane.b32.xlu0 %v556, 55
    %v558 = vpop.permute.xlu0 %557
    %vm560 = vcmask 549400
    %561 = vst.msk [vmem:[#allocation5] sm:$0x1] %vm560, %v558
    %v562 = vld [vmem:[#allocation2 + $0x2] sm:$0x1]
    %v564 = vperm.slane %v562, 0
    %565 = vrot.lane.b32.xlu0 %v564, 52
    %v566 = vpop.permute.xlu0 %565
    %vm568 = vcmask 557600
    %569 = vst.msk [vmem:[#allocation5] sm:$0x1] %vm568, %v566
    %v570 = vld [vmem:[#allocation2 + $0x2] sm:$0x1]
    %v572 = vperm.slane %v570, 0
    %573 = vrot.lane.b32.xlu0 %v572, 49
    %v574 = vpop.permute.xlu0 %573
    %vm576 = vcmask 565800
    %577 = vst.msk [vmem:[#allocation5] sm:$0x1] %vm576, %v574
    %v578 = vld [vmem:[#allocation2 + $0x2] sm:$0x1]
    %v580 = vperm.slane %v578, 0
    %581 = vrot.lane.b32.xlu0 %v580, 46
    %v582 = vpop.permute.xlu0 %581
    %vm584 = vcmask 574000
    %585 = vst.msk [vmem:[#allocation5] sm:$0x1] %vm584, %v582
    %v586 = vld [vmem:[#allocation2 + $0x2] sm:$0x1]
    %v588 = vperm.slane %v586, 0
    %589 = vrot.lane.b32.xlu0 %v588, 43
    %v590 = vpop.permute.xlu0 %589
    %vm592 = vcmask 582200
    %593 = vst.msk [vmem:[#allocation5] sm:$0x1] %vm592, %v590
    %v594 = vld [vmem:[#allocation2 + $0x2] sm:$0x1]
    %v596 = vperm.slane %v594, 0
    %597 = vrot.lane.b32.xlu0 %v596, 40
    %v598 = vpop.permute.xlu0 %597
    %vm600 = vcmask 590400
    %601 = vst.msk [vmem:[#allocation5] sm:$0x1] %vm600, %v598
    %v602 = vld [vmem:[#allocation2 + $0x2] sm:$0x1]
    %v604 = vperm.slane %v602, 0
    %605 = vrot.lane.b32.xlu0 %v604, 37
    %v606 = vpop.permute.xlu0 %605
    %vm608 = vcmask 598600
    %609 = vst.msk [vmem:[#allocation5] sm:$0x1] %vm608, %v606
    %v610 = vld [vmem:[#allocation2 + $0x2] sm:$0x1]
    %v612 = vperm.slane %v610, 0
    %613 = vrot.lane.b32.xlu0 %v612, 34
    %v614 = vpop.permute.xlu0 %613
    %vm616 = vcmask 606800
    %617 = vst.msk [vmem:[#allocation5] sm:$0x1] %vm616, %v614
    %v618 = vld [vmem:[#allocation2 + $0x2] sm:$0x1]
    %v620 = vperm.slane %v618, 0
    %621 = vrot.lane.b32.xlu0 %v620, 31
    %v622 = vpop.permute.xlu0 %621
    %vm624 = vcmask 615000
    %625 = vst.msk [vmem:[#allocation5] sm:$0x1] %vm624, %v622
    %v626 = vld [vmem:[#allocation2 + $0x2] sm:$0x1]
    %v628 = vperm.slane %v626, 0
    %629 = vrot.lane.b32.xlu0 %v628, 28
    %v630 = vpop.permute.xlu0 %629
    %vm632 = vcmask 623200
    %633 = vst.msk [vmem:[#allocation5] sm:$0x1] %vm632, %v630
    %v634 = vld [vmem:[#allocation2 + $0x2] sm:$0x1]
    %v636 = vperm.slane %v634, 0
    %637 = vrot.lane.b32.xlu0 %v636, 25
    %v638 = vpop.permute.xlu0 %637
    %vm640 = vcmask 631400
    %641 = vst.msk [vmem:[#allocation5] sm:$0x1] %vm640, %v638
    %v642 = vld [vmem:[#allocation2 + $0x2] sm:$0x1]
    %v644 = vperm.slane %v642, 0
    %645 = vrot.lane.b32.xlu0 %v644, 22
    %v646 = vpop.permute.xlu0 %645
    %vm648 = vcmask 639600
    %649 = vst.msk [vmem:[#allocation5] sm:$0x1] %vm648, %v646
    %v650 = vld [vmem:[#allocation2 + $0x2] sm:$0x1]
    %v652 = vperm.slane %v650, 0
    %653 = vrot.lane.b32.xlu0 %v652, 19
    %v654 = vpop.permute.xlu0 %653
    %vm656 = vcmask 647800
    %657 = vst.msk [vmem:[#allocation5] sm:$0x1] %vm656, %v654
    %v658 = vld [vmem:[#allocation2 + $0x2] sm:$0x1]
    %v660 = vperm.slane %v658, 0
    %661 = vrot.lane.b32.xlu0 %v660, 16
    %v662 = vpop.permute.xlu0 %661
    %vm664 = vcmask 656000
    %665 = vst.msk [vmem:[#allocation5] sm:$0x1] %vm664, %v662
    %v666 = vld [vmem:[#allocation2 + $0x2] sm:$0x1]
    %v668 = vperm.slane %v666, 0
    %669 = vrot.lane.b32.xlu0 %v668, 13
    %v670 = vpop.permute.xlu0 %669
    %vm672 = vcmask 664200
    %673 = vst.msk [vmem:[#allocation5] sm:$0x1] %vm672, %v670
    %v674 = vld [vmem:[#allocation2 + $0x2] sm:$0x1]
    %v676 = vperm.slane %v674, 0
    %677 = vrot.lane.b32.xlu0 %v676, 10
    %v678 = vpop.permute.xlu0 %677
    %vm680 = vcmask 672400
    %681 = vst.msk [vmem:[#allocation5] sm:$0x1] %vm680, %v678
    %v682 = vld [vmem:[#allocation2 + $0x2] sm:$0x1]
    %v684 = vperm.slane %v682, 0
    %685 = vrot.lane.b32.xlu0 %v684, 7
    %v686 = vpop.permute.xlu0 %685
    %vm688 = vcmask 680600
    %689 = vst.msk [vmem:[#allocation5] sm:$0x1] %vm688, %v686
    %v690 = vld [vmem:[#allocation2 + $0x2] sm:$0x1]
    %v692 = vperm.slane %v690, 0
    %693 = vrot.lane.b32.xlu0 %v692, 4
    %v694 = vpop.permute.xlu0 %693
    %vm696 = vcmask 688800
    %697 = vst.msk [vmem:[#allocation5] sm:$0x1] %vm696, %v694
    %v698 = vld [vmem:[#allocation2 + $0x2] sm:$0x1]
    %v700 = vperm.slane %v698, 0
    %701 = vrot.lane.b32.xlu0 %v700, 1
    %v702 = vpop.permute.xlu0 %701
    %vm704 = vcmask 697000
    %705 = vst.msk [vmem:[#allocation5] sm:$0x1] %vm704, %v702
    %v706 = vld [vmem:[#allocation2 + $0x2] sm:$0x1]
    %v708 = vperm.slane %v706, 0
    %709 = vrot.lane.b32.xlu0 %v708, 126
    %v710 = vpop.permute.xlu0 %709
    %vm712 = vcmask 705200
    %713 = vst.msk [vmem:[#allocation5] sm:$0x1] %vm712, %v710
    %v714 = vld [vmem:[#allocation2 + $0x2] sm:$0x1]
    %v716 = vperm.slane %v714, 0
    %717 = vrot.lane.b32.xlu0 %v716, 123
    %v718 = vpop.permute.xlu0 %717
    %vm720 = vcmask 713400
    %721 = vst.msk [vmem:[#allocation5] sm:$0x1] %vm720, %v718
    %v722 = vld [vmem:[#allocation2 + $0x2] sm:$0x1]
    %v724 = vperm.slane %v722, 0
    %725 = vrot.lane.b32.xlu0 %v724, 120
    %v726 = vpop.permute.xlu0 %725
    %vm728 = vcmask 721600
    %729 = vst.msk [vmem:[#allocation5] sm:$0x1] %vm728, %v726
    %v730 = vld [vmem:[#allocation2 + $0x2] sm:$0x1]
    %v732 = vperm.slane %v730, 0
    %733 = vrot.lane.b32.xlu0 %v732, 117
    %v734 = vpop.permute.xlu0 %733
    %vm736 = vcmask 729800
    %737 = vst.msk [vmem:[#allocation5] sm:$0x1] %vm736, %v734
    %v738 = vld [vmem:[#allocation2 + $0x2] sm:$0x1]
    %v740 = vperm.slane %v738, 0
    %741 = vrot.lane.b32.xlu0 %v740, 114
    %v742 = vpop.permute.xlu0 %741
    %vm744 = vcmask 738000
    %745 = vst.msk [vmem:[#allocation5] sm:$0x1] %vm744, %v742
    %v746 = vld [vmem:[#allocation2 + $0x2] sm:$0x1]
    %v748 = vperm.slane %v746, 0
    %749 = vrot.lane.b32.xlu0 %v748, 111
    %v750 = vpop.permute.xlu0 %749
    %vm752 = vcmask 746200
    %753 = vst.msk [vmem:[#allocation5] sm:$0x1] %vm752, %v750
    %v754 = vld [vmem:[#allocation2 + $0x2] sm:$0x1]
    %v756 = vperm.slane %v754, 0
    %757 = vrot.lane.b32.xlu0 %v756, 108
    %v758 = vpop.permute.xlu0 %757
    %vm760 = vcmask 754400
    %761 = vst.msk [vmem:[#allocation5] sm:$0x1] %vm760, %v758
    %v762 = vld [vmem:[#allocation2 + $0x2] sm:$0x1]
    %v764 = vperm.slane %v762, 0
    %765 = vrot.lane.b32.xlu0 %v764, 105
    %v766 = vpop.permute.xlu0 %765
    %vm768 = vcmask 762600
    %769 = vst.msk [vmem:[#allocation5] sm:$0x1] %vm768, %v766
    %v770 = vld [vmem:[#allocation2 + $0x2] sm:$0x1]
    %v772 = vperm.slane %v770, 0
    %773 = vrot.lane.b32.xlu0 %v772, 102
    %v774 = vpop.permute.xlu0 %773
    %vm776 = vcmask 770800
    %777 = vst.msk [vmem:[#allocation5] sm:$0x1] %vm776, %v774
    %v778 = vld [vmem:[#allocation2 + $0x2] sm:$0x1]
    %v780 = vperm.slane %v778, 0
    %781 = vrot.lane.b32.xlu0 %v780, 99
    %v782 = vpop.permute.xlu0 %781
    %vm784 = vcmask 779000
    %785 = vst.msk [vmem:[#allocation5] sm:$0x1] %vm784, %v782
    %v786 = vld [vmem:[#allocation2 + $0x3] sm:$0x1]
    %v788 = vperm.slane %v786, 0
    %789 = vrot.lane.b32.xlu0 %v788, 96
    %v790 = vpop.permute.xlu0 %789
    %vm792 = vcmask 787200
    %793 = vst.msk [vmem:[#allocation5] sm:$0x1] %vm792, %v790
    %v794 = vld [vmem:[#allocation2 + $0x3] sm:$0x1]
    %v796 = vperm.slane %v794, 0
    %797 = vrot.lane.b32.xlu0 %v796, 93
    %v798 = vpop.permute.xlu0 %797
    %vm800 = vcmask 795400
    %801 = vst.msk [vmem:[#allocation5] sm:$0x1] %vm800, %v798
    %v802 = vld [vmem:[#allocation2 + $0x3] sm:$0x1]
    %v804 = vperm.slane %v802, 0
    %805 = vrot.lane.b32.xlu0 %v804, 90
    %v806 = vpop.permute.xlu0 %805
    %vm808 = vcmask 803600
    %809 = vst.msk [vmem:[#allocation5] sm:$0x1] %vm808, %v806
    %v810 = vld [vmem:[#allocation2 + $0x3] sm:$0x1]
    %v812 = vperm.slane %v810, 0
    %813 = vrot.lane.b32.xlu0 %v812, 87
    %v814 = vpop.permute.xlu0 %813
    %vm816 = vcmask 811800
    %817 = vst.msk [vmem:[#allocation5] sm:$0x1] %vm816, %v814
    %v818 = vld [vmem:[#allocation2 + $0x3] sm:$0x1]
    %v820 = vperm.slane %v818, 0
    %821 = vrot.lane.b32.xlu0 %v820, 84
    %v822 = vpop.permute.xlu0 %821
    %vm824 = vcmask 820000
    %825 = vst.msk [vmem:[#allocation5] sm:$0x1] %vm824, %v822
    %v826 = vld [vmem:[#allocation2 + $0x3] sm:$0x1]
    %v828 = vperm.slane %v826, 0
    %829 = vrot.lane.b32.xlu0 %v828, 81
    %v830 = vpop.permute.xlu0 %829
    %vm832 = vcmask 828200
    %833 = vst.msk [vmem:[#allocation5] sm:$0x1] %vm832, %v830
    %v834 = vld [vmem:[#allocation2 + $0x3] sm:$0x1]
    %v836 = vperm.slane %v834, 0
    %837 = vrot.lane.b32.xlu0 %v836, 78
    %v838 = vpop.permute.xlu0 %837
    %vm840 = vcmask 836400
    %841 = vst.msk [vmem:[#allocation5] sm:$0x1] %vm840, %v838
    %v842 = vld [vmem:[#allocation2 + $0x3] sm:$0x1]
    %v844 = vperm.slane %v842, 0
    %845 = vrot.lane.b32.xlu0 %v844, 75
    %v846 = vpop.permute.xlu0 %845
    %vm848 = vcmask 844600
    %849 = vst.msk [vmem:[#allocation5] sm:$0x1] %vm848, %v846
    %v850 = vld [vmem:[#allocation2 + $0x3] sm:$0x1]
    %v852 = vperm.slane %v850, 0
    %853 = vrot.lane.b32.xlu0 %v852, 72
    %v854 = vpop.permute.xlu0 %853
    %vm856 = vcmask 852800
    %857 = vst.msk [vmem:[#allocation5] sm:$0x1] %vm856, %v854
    %v858 = vld [vmem:[#allocation2 + $0x3] sm:$0x1]
    %v860 = vperm.slane %v858, 0
    %861 = vrot.lane.b32.xlu0 %v860, 69
    %v862 = vpop.permute.xlu0 %861
    %vm864 = vcmask 861000
    %865 = vst.msk [vmem:[#allocation5] sm:$0x1] %vm864, %v862
    %v866 = vld [vmem:[#allocation2 + $0x3] sm:$0x1]
    %v868 = vperm.slane %v866, 0
    %869 = vrot.lane.b32.xlu0 %v868, 66
    %v870 = vpop.permute.xlu0 %869
    %vm872 = vcmask 869200
    %873 = vst.msk [vmem:[#allocation5] sm:$0x1] %vm872, %v870
    %v874 = vld [vmem:[#allocation2 + $0x3] sm:$0x1]
    %v876 = vperm.slane %v874, 0
    %877 = vrot.lane.b32.xlu0 %v876, 63
    %v878 = vpop.permute.xlu0 %877
    %vm880 = vcmask 877400
    %881 = vst.msk [vmem:[#allocation5] sm:$0x1] %vm880, %v878
    %v882 = vld [vmem:[#allocation2 + $0x3] sm:$0x1]
    %v884 = vperm.slane %v882, 0
    %885 = vrot.lane.b32.xlu0 %v884, 60
    %v886 = vpop.permute.xlu0 %885
    %vm888 = vcmask 885600
    %889 = vst.msk [vmem:[#allocation5] sm:$0x1] %vm888, %v886
    %v890 = vld [vmem:[#allocation2 + $0x3] sm:$0x1]
    %v892 = vperm.slane %v890, 0
    %893 = vrot.lane.b32.xlu0 %v892, 57
    %v894 = vpop.permute.xlu0 %893
    %vm896 = vcmask 893800
    %897 = vst.msk [vmem:[#allocation5] sm:$0x1] %vm896, %v894
    %v898 = vld [vmem:[#allocation2 + $0x3] sm:$0x1]
    %v900 = vperm.slane %v898, 0
    %901 = vrot.lane.b32.xlu0 %v900, 54
    %v902 = vpop.permute.xlu0 %901
    %vm904 = vcmask 902000
    %905 = vst.msk [vmem:[#allocation5] sm:$0x1] %vm904, %v902
    %v906 = vld [vmem:[#allocation2 + $0x3] sm:$0x1]
    %v908 = vperm.slane %v906, 0
    %909 = vrot.lane.b32.xlu0 %v908, 51
    %v910 = vpop.permute.xlu0 %909
    %vm912 = vcmask 910200
    %913 = vst.msk [vmem:[#allocation5] sm:$0x1] %vm912, %v910
    %v914 = vld [vmem:[#allocation2 + $0x3] sm:$0x1]
    %v916 = vperm.slane %v914, 0
    %917 = vrot.lane.b32.xlu0 %v916, 48
    %v918 = vpop.permute.xlu0 %917
    %vm920 = vcmask 918400
    %921 = vst.msk [vmem:[#allocation5] sm:$0x1] %vm920, %v918
    %v922 = vld [vmem:[#allocation2 + $0x3] sm:$0x1]
    %v924 = vperm.slane %v922, 0
    %925 = vrot.lane.b32.xlu0 %v924, 45
    %v926 = vpop.permute.xlu0 %925
    %vm928 = vcmask 926600
    %929 = vst.msk [vmem:[#allocation5] sm:$0x1] %vm928, %v926
    %v930 = vld [vmem:[#allocation2 + $0x3] sm:$0x1]
    %v932 = vperm.slane %v930, 0
    %933 = vrot.lane.b32.xlu0 %v932, 42
    %v934 = vpop.permute.xlu0 %933
    %vm936 = vcmask 934800
    %937 = vst.msk [vmem:[#allocation5] sm:$0x1] %vm936, %v934
    %v938 = vld [vmem:[#allocation2 + $0x3] sm:$0x1]
    %v940 = vperm.slane %v938, 0
    %941 = vrot.lane.b32.xlu0 %v940, 39
    %v942 = vpop.permute.xlu0 %941
    %vm944 = vcmask 943000
    %945 = vst.msk [vmem:[#allocation5] sm:$0x1] %vm944, %v942
    %v946 = vld [vmem:[#allocation2 + $0x3] sm:$0x1]
    %v948 = vperm.slane %v946, 0
    %949 = vrot.lane.b32.xlu0 %v948, 36
    %v950 = vpop.permute.xlu0 %949
    %vm952 = vcmask 951200
    %953 = vst.msk [vmem:[#allocation5] sm:$0x1] %vm952, %v950
    %v954 = vld [vmem:[#allocation2 + $0x3] sm:$0x1]
    %v956 = vperm.slane %v954, 0
    %957 = vrot.lane.b32.xlu0 %v956, 33
    %v958 = vpop.permute.xlu0 %957
    %vm960 = vcmask 959400
    %961 = vst.msk [vmem:[#allocation5] sm:$0x1] %vm960, %v958
    %v962 = vld [vmem:[#allocation2 + $0x3] sm:$0x1]
    %v964 = vperm.slane %v962, 0
    %965 = vrot.lane.b32.xlu0 %v964, 30
    %v966 = vpop.permute.xlu0 %965
    %vm968 = vcmask 967600
    %969 = vst.msk [vmem:[#allocation5] sm:$0x1] %vm968, %v966
    %v970 = vld [vmem:[#allocation2 + $0x3] sm:$0x1]
    %v972 = vperm.slane %v970, 0
    %973 = vrot.lane.b32.xlu0 %v972, 27
    %v974 = vpop.permute.xlu0 %973
    %vm976 = vcmask 975800
    %977 = vst.msk [vmem:[#allocation5] sm:$0x1] %vm976, %v974
    %v978 = vld [vmem:[#allocation2 + $0x3] sm:$0x1]
    %v980 = vperm.slane %v978, 0
    %981 = vrot.lane.b32.xlu0 %v980, 24
    %v982 = vpop.permute.xlu0 %981
    %vm984 = vcmask 984000
    %985 = vst.msk [vmem:[#allocation5] sm:$0x1] %vm984, %v982
    %v986 = vld [vmem:[#allocation2 + $0x3] sm:$0x1]
    %v988 = vperm.slane %v986, 0
    %989 = vrot.lane.b32.xlu0 %v988, 21
    %v990 = vpop.permute.xlu0 %989
    %vm992 = vcmask 992200
    %993 = vst.msk [vmem:[#allocation5] sm:$0x1] %vm992, %v990
    %v994 = vld [vmem:[#allocation2 + $0x3] sm:$0x1]
    %v996 = vperm.slane %v994, 0
    %997 = vrot.lane.b32.xlu0 %v996, 18
    %v998 = vpop.permute.xlu0 %997
    %vm1000 = vcmask 1000400
    %1001 = vst.msk [vmem:[#allocation5] sm:$0x1] %vm1000, %v998
    %v1002 = vld [vmem:[#allocation2 + $0x3] sm:$0x1]
    %v1004 = vperm.slane %v1002, 0
    %1005 = vrot.lane.b32.xlu0 %v1004, 15
    %v1006 = vpop.permute.xlu0 %1005
    %vm1008 = vcmask 1008600
    %1009 = vst.msk [vmem:[#allocation5] sm:$0x1] %vm1008, %v1006
    %v1010 = vld [vmem:[#allocation2 + $0x3] sm:$0x1]
    %v1012 = vperm.slane %v1010, 0
    %1013 = vrot.lane.b32.xlu0 %v1012, 12
    %v1014 = vpop.permute.xlu0 %1013
    %vm1016 = vcmask 1016800
    %1017 = vst.msk [vmem:[#allocation5] sm:$0x1] %vm1016, %v1014
    %v1018 = vld [vmem:[#allocation2 + $0x3] sm:$0x1]
    %v1020 = vperm.slane %v1018, 0
    %1021 = vrot.lane.b32.xlu0 %v1020, 9
    %v1022 = vpop.permute.xlu0 %1021
    %vm1024 = vcmask 1025000
    %1025 = vst.msk [vmem:[#allocation5] sm:$0x1] %vm1024, %v1022
    %v1026 = vld [vmem:[#allocation2 + $0x3] sm:$0x1]
    %v1028 = vperm.slane %v1026, 0
    %1029 = vrot.lane.b32.xlu0 %v1028, 6
    %v1030 = vpop.permute.xlu0 %1029
    %vm1032 = vcmask 1033200
    %1033 = vst.msk [vmem:[#allocation5] sm:$0x1] %vm1032, %v1030
    %v1034 = vld [vmem:[#allocation2 + $0x3] sm:$0x1]
    %v1036 = vperm.slane %v1034, 0
    %1037 = vrot.lane.b32.xlu0 %v1036, 3
    %v1038 = vpop.permute.xlu0 %1037
    %vm1040 = vcmask 1041400
    %1041 = vst.msk [vmem:[#allocation5] sm:$0x1] %vm1040, %v1038
    // Predicated region
    $region10: #{tpu_custom_call.1} parent=1 // pred_check
      _
    $region11: #{tpu_custom_call.1} parent=1 // pred_check_branch
      %1043 = sbr.rel (0) target = $region13
    $region12: #{tpu_custom_call.1} parent=1 // pred_region
      %1045 = vsyncadd [#allocation4], 0
      %s1047 = sshll.u32 [#allocation5], 4
      %s1048 = int_to_ptr.vmem [resolvable:$true] %s1047
      %s1049 = sshll.u32 %s1, 4
      %s1050 = int_to_ptr.hbm [resolvable:$true] %s1049
      %1052 = dma.vmem_to_hbm [thread:$0]  %s1048, 16, %s1050, [#allocation4]
    $region13: #{tpu_custom_call.1} parent=1 // pred_fallthru
      _
    // Predicated region
    $region14: #{tpu_custom_call.1} parent=1 // pred_check
      _
    $region15: #{tpu_custom_call.1} parent=1 // pred_check_branch
      %1054 = sbr.rel (0) target = $region17
    $region16: #{tpu_custom_call.1} parent=1 // pred_region
      %1056 = dma.done [#allocation4], 16
    $region17: #{tpu_custom_call.1} parent=1 // pred_fallthru
      _
    %1057 = vsyncpa [#allocation3], 1
    %1058 = vsyncpa [#allocation4], 1

</llo_original>
